<compile_context>
chip_gen: v6e
topology: v6e:2x2x1
jax: 0.10.0
libtpu: 0.0.40
codegen_flags: <defaults>
</compile_context>

<pallas_src>
import functools

import jax
import jax.numpy as jnp
from jax.experimental import pallas as pl
from jax.experimental.pallas import tpu as pltpu

# Small demo sizes (PyTorch defaults are width=256, depth=3).
D_OBS = 16
D_ACT = 8
WIDTH = 32
DEPTH = 3
BATCH = 256
C_SMOOTH = 0.1
_LN_EPS = 1e-5                       # PyTorch nn.LayerNorm default eps.

TB = 128                             # batch tile (sublane-aligned; VMEM use is
                                     # ~1 MiB, safe even on v7x's 64 MiB VMEM)
PW = ((max(WIDTH, D_ACT) + 127) // 128) * 128   # lane-padded feature width
KH = 2 * PW                          # weight rows per CReLU layer
K0 = D_OBS                           # weight rows of the first layer
K_TOTAL = K0 + DEPTH * KH
NV = 3 * DEPTH + 1                   # (bias, gamma, beta) per block + head bias

assert D_OBS % 8 == 0, "demo assumes sublane-aligned obs dim"
assert WIDTH <= PW and D_ACT <= PW

# NOTE: weights could be stored in bf16 on v6e/v7x to halve weight HBM traffic
# (accumulate in f32 via preferred_element_type); kept f32 here so the kernel
# matches the f32 reference exactly.


# ----------------------------- kernel helpers ------------------------------

def _layernorm(h, g, b):
    # h: (TB, PW) with exact zeros in columns WIDTH:PW.  Single-pass stats over
    # the WIDTH valid columns (zero padding contributes 0 to both sums).
    inv_n = 1.0 / WIDTH
    s1 = jnp.sum(h, axis=-1, keepdims=True)
    s2 = jnp.sum(h * h, axis=-1, keepdims=True)
    mu = s1 * inv_n
    var = s2 * inv_n - mu * mu
    # gamma/beta are zero in padding columns -> padded lanes stay exactly 0.
    return (h - mu) * jax.lax.rsqrt(var + _LN_EPS) * g + b


def _crelu(h):
    # (TB, PW) -> (TB, 2*PW): [relu(h) | relu(-h)].  One lane-concat so the
    # following Linear is a single MXU matmul instead of two.
    return jnp.concatenate([jnp.maximum(h, 0.0), jnp.maximum(-h, 0.0)], axis=-1)


def _mlp(x, w_ref, v_ref):
    # Block 0: Linear(D_OBS -> WIDTH) + LayerNorm.
    h = jnp.dot(x, w_ref[0:K0, :], preferred_element_type=jnp.float32)
    h = _layernorm(h + v_ref[0:1, :], v_ref[1:2, :], v_ref[2:3, :])
    # Blocks 1..DEPTH-1: CReLU -> Linear(2W -> W) -> LayerNorm.
    for l in range(1, DEPTH):
        off = K0 + (l - 1) * KH
        h = jnp.dot(_crelu(h), w_ref[off:off + KH, :],
                    preferred_element_type=jnp.float32)
        h = _layernorm(h + v_ref[3 * l:3 * l + 1, :],
                       v_ref[3 * l + 1:3 * l + 2, :],
                       v_ref[3 * l + 2:3 * l + 3, :])
    # Head: CReLU -> Linear(2W -> D_ACT) -> Tanh (lane-dense, D_ACT valid cols).
    off = K0 + (DEPTH - 1) * KH
    o = jnp.dot(_crelu(h), w_ref[off:off + KH, :],
                preferred_element_type=jnp.float32)
    return jnp.tanh(o + v_ref[3 * DEPTH:3 * DEPTH + 1, :])


def _train_kernel(x_ref, w_ref, v_ref, eps_ref, out_ref):
    o = _mlp(x_ref[...], w_ref, v_ref)
    out_ref[...] = jnp.clip(o + eps_ref[...], -0.9999, 0.9999)


def _eval_kernel(x_ref, w_ref, v_ref, out_ref):
    out_ref[...] = _mlp(x_ref[...], w_ref, v_ref)


# --------------------------- params / packing ------------------------------

def init_params(key):
    """PyTorch-style uniform(+/- 1/sqrt(fan_in)) init, natural shapes."""
    def lin(k, fan_in, fan_out):
        kw, kb = jax.random.split(k)
        lim = 1.0 / jnp.sqrt(jnp.float32(fan_in))
        w = jax.random.uniform(kw, (fan_in, fan_out), jnp.float32, -lim, lim)
        b = jax.random.uniform(kb, (fan_out,), jnp.float32, -lim, lim)
        return w, b

    ks = jax.random.split(key, DEPTH + 1)
    p = {}
    p["w0"], p["b0"] = lin(ks[0], D_OBS, WIDTH)
    p["g0"] = jnp.ones((WIDTH,), jnp.float32)
    p["be0"] = jnp.zeros((WIDTH,), jnp.float32)
    for l in range(1, DEPTH):
        p[f"w{l}"], p[f"b{l}"] = lin(ks[l], 2 * WIDTH, WIDTH)
        p[f"g{l}"] = jnp.ones((WIDTH,), jnp.float32)
        p[f"be{l}"] = jnp.zeros((WIDTH,), jnp.float32)
    p[f"w{DEPTH}"], p[f"b{DEPTH}"] = lin(ks[DEPTH], 2 * WIDTH, D_ACT)
    return p


def pack_params(p):
    """Pack all params into two lane-padded slabs (done once, off the hot path).

    W slab (K_TOTAL, PW): layer-0 weight, then per CReLU layer a 2*PW-row block
    with the 'positive' half at rows [0:WIDTH) and the 'negative' half at rows
    [PW:PW+WIDTH); all other rows/columns are zero.
    V slab (NV, PW): rows [b, gamma, beta] per block, then the head bias;
    padding columns are zero (gamma padding MUST be zero, not one).
    """
    W = jnp.zeros((K_TOTAL, PW), jnp.float32)
    V = jnp.zeros((NV, PW), jnp.float32)

    W = W.at[0:D_OBS, 0:WIDTH].set(p["w0"])
    V = V.at[0, 0:WIDTH].set(p["b0"])
    V = V.at[1, 0:WIDTH].set(p["g0"])
    V = V.at[2, 0:WIDTH].set(p["be0"])
    for l in range(1, DEPTH):
        w = p[f"w{l}"]                         # (2*WIDTH, WIDTH)
        off = K0 + (l - 1) * KH
        W = W.at[off:off + WIDTH, 0:WIDTH].set(w[0:WIDTH])
        W = W.at[off + PW:off + PW + WIDTH, 0:WIDTH].set(w[WIDTH:])
        V = V.at[3 * l, 0:WIDTH].set(p[f"b{l}"])
        V = V.at[3 * l + 1, 0:WIDTH].set(p[f"g{l}"])
        V = V.at[3 * l + 2, 0:WIDTH].set(p[f"be{l}"])
    w = p[f"w{DEPTH}"]                         # (2*WIDTH, D_ACT)
    off = K0 + (DEPTH - 1) * KH
    W = W.at[off:off + WIDTH, 0:D_ACT].set(w[0:WIDTH])
    W = W.at[off + PW:off + PW + WIDTH, 0:D_ACT].set(w[WIDTH:])
    V = V.at[3 * DEPTH, 0:D_ACT].set(p[f"b{DEPTH}"])
    return W, V


# ------------------------------ pure-JAX ref --------------------------------

def _ln_ref(h, g, b):
    mu = jnp.mean(h, axis=-1, keepdims=True)
    var = jnp.mean((h - mu) ** 2, axis=-1, keepdims=True)
    return (h - mu) * jax.lax.rsqrt(var + _LN_EPS) * g + b


def ref_forward(x, p):
    h = _ln_ref(x @ p["w0"] + p["b0"], p["g0"], p["be0"])
    for l in range(1, DEPTH):
        hc = jnp.concatenate([jnp.maximum(h, 0.0), jnp.maximum(-h, 0.0)], -1)
        h = _ln_ref(hc @ p[f"w{l}"] + p[f"b{l}"], p[f"g{l}"], p[f"be{l}"])
    hc = jnp.concatenate([jnp.maximum(h, 0.0), jnp.maximum(-h, 0.0)], -1)
    return jnp.tanh(hc @ p[f"w{DEPTH}"] + p[f"b{DEPTH}"])


# -------------------------------- wrapper -----------------------------------

@functools.partial(jax.jit, static_argnames=("is_training",))
def actor_net_smooth(x, w_slab, v_slab, noise_key, is_training=True):
    batch = x.shape[0]
    pad_b = (-batch) % TB
    xb = jnp.pad(x, ((0, pad_b), (0, 0))) if pad_b else x
    bp = batch + pad_b
    grid = (bp // TB,)

    x_spec = pl.BlockSpec((TB, D_OBS), lambda i: (i, 0))
    w_spec = pl.BlockSpec((K_TOTAL, PW), lambda i: (0, 0))    # VMEM-resident
    v_spec = pl.BlockSpec((NV, PW), lambda i: (0, 0))         # VMEM-resident
    eps_spec = pl.BlockSpec((TB, PW), lambda i: (i, 0))
    o_spec = pl.BlockSpec((TB, PW), lambda i: (i, 0))         # lane-dense store
    cparams = pltpu.CompilerParams(dimension_semantics=("parallel",))
    out_shape = jax.ShapeDtypeStruct((bp, PW), jnp.float32)

    if is_training:
        eps = jax.random.normal(noise_key, (bp, PW), jnp.float32) * C_SMOOTH
        out = pl.pallas_call(
            _train_kernel,
            out_shape=out_shape,
            grid_spec=pltpu.PrefetchScalarGridSpec(
                num_scalar_prefetch=0, grid=grid,
                in_specs=[x_spec, w_spec, v_spec, eps_spec],
                out_specs=o_spec),
            compiler_params=cparams,
        )(xb, w_slab, v_slab, eps)
    else:
        out = pl.pallas_call(
            _eval_kernel,
            out_shape=out_shape,
            grid_spec=pltpu.PrefetchScalarGridSpec(
                num_scalar_prefetch=0, grid=grid,
                in_specs=[x_spec, w_spec, v_spec],
                out_specs=o_spec),
            compiler_params=cparams,
        )(xb, w_slab, v_slab)

    # Module returns (out, None); trim batch padding and lane padding.
    return out[:batch, :D_ACT], None


# --------------------------------- main -------------------------------------

if __name__ == "__main__":
    key = jax.random.PRNGKey(0)
    pkey, xkey, nkey = jax.random.split(key, 3)

    params = init_params(pkey)
    w_slab, v_slab = pack_params(params)
    x = jax.random.normal(xkey, (BATCH, D_OBS), jnp.float32)

    # Eval mode (deterministic): check against the pure-JAX reference.
    out_eval, aux = actor_net_smooth(x, w_slab, v_slab, nkey, is_training=False)
    out_eval = jax.block_until_ready(out_eval)
    ref = ref_forward(x, params)
    assert out_eval.shape == (BATCH, D_ACT)
    assert aux is None
    max_err = float(jnp.max(jnp.abs(out_eval - ref)))
    assert max_err < 5e-3, max_err

    # Training mode: gaussian smoothing noise + clamp.
    out_tr, _ = actor_net_smooth(x, w_slab, v_slab, nkey, is_training=True)
    out_tr = jax.block_until_ready(out_tr)
    assert out_tr.shape == (BATCH, D_ACT)
    assert bool(jnp.all(jnp.abs(out_tr) <= 0.9999))

    print("KERNEL_OK")
</pallas_src>

<mosaic_0001>
module attributes {stable_mosaic.version = 11 : i64} {
  func.func @_eval_kernel(%arg0: i32, %arg1: memref<128x16xf32, #tpu.memory_space<vmem>>, %arg2: memref<784x128xf32, #tpu.memory_space<vmem>>, %arg3: memref<10x128xf32, #tpu.memory_space<vmem>>, %arg4: memref<128x128xf32, #tpu.memory_space<vmem>>) attributes {dimension_semantics = [#tpu.dimension_semantics<parallel>], iteration_bounds = array<i64: 2>, scalar_prefetch = 0 : i64, scratch_operands = 0 : i64, tpu.core_type = #tpu.core_type<tc>, window_params = [{transform_indices = @transform_0, window_bounds = array<i64: 128, 16>}, {pipeline_mode = #tpu.pipeline_mode<synchronous>, transform_indices = @transform_1, window_bounds = array<i64: 784, 128>}, {pipeline_mode = #tpu.pipeline_mode<synchronous>, transform_indices = @transform_2, window_bounds = array<i64: 10, 128>}, {transform_indices = @transform_3, window_bounds = array<i64: 128, 128>}]} {
    %c0 = arith.constant 0 : index
    %c0_0 = arith.constant 0 : index
    %0 = vector.load %arg1[%c0, %c0_0] : memref<128x16xf32, #tpu.memory_space<vmem>>, vector<128x16xf32>
    %c0_1 = arith.constant 0 : index
    %c0_2 = arith.constant 0 : index
    %1 = vector.load %arg2[%c0_1, %c0_2] : memref<784x128xf32, #tpu.memory_space<vmem>>, vector<16x128xf32>
    %cst = arith.constant dense<0.000000e+00> : vector<128x128xf32>
    %2 = tpu.matmul %0, %1, %cst {dimension_numbers = #tpu.dot_dimension_numbers<[1], [0], [0], [1], [0, 0, 1, 1], [], []>} : vector<128x16xf32>, vector<16x128xf32>, vector<128x128xf32> -> vector<128x128xf32>
    %c0_3 = arith.constant 0 : index
    %c0_4 = arith.constant 0 : index
    %3 = vector.load %arg3[%c0_3, %c0_4] : memref<10x128xf32, #tpu.memory_space<vmem>>, vector<1x128xf32>
    %4 = vector.broadcast %3 : vector<1x128xf32> to vector<128x128xf32>
    %5 = arith.addf %2, %4 : vector<128x128xf32>
    %c1 = arith.constant 1 : index
    %c0_5 = arith.constant 0 : index
    %6 = vector.load %arg3[%c1, %c0_5] : memref<10x128xf32, #tpu.memory_space<vmem>>, vector<1x128xf32>
    %c2 = arith.constant 2 : index
    %c0_6 = arith.constant 0 : index
    %7 = vector.load %arg3[%c2, %c0_6] : memref<10x128xf32, #tpu.memory_space<vmem>>, vector<1x128xf32>
    %cst_7 = arith.constant dense<0.000000e+00> : vector<128xf32>
    %8 = vector.multi_reduction <add>, %5, %cst_7 [1] : vector<128x128xf32> to vector<128xf32>
    %9 = vector.shape_cast %8 : vector<128xf32> to vector<128x1xf32>
    %10 = arith.mulf %5, %5 : vector<128x128xf32>
    %cst_8 = arith.constant dense<0.000000e+00> : vector<128xf32>
    %11 = vector.multi_reduction <add>, %10, %cst_8 [1] : vector<128x128xf32> to vector<128xf32>
    %12 = vector.shape_cast %11 : vector<128xf32> to vector<128x1xf32>
    %cst_9 = arith.constant 3.125000e-02 : f32
    %13 = vector.broadcast %cst_9 : f32 to vector<128x1xf32>
    %14 = arith.mulf %9, %13 : vector<128x1xf32>
    %cst_10 = arith.constant 3.125000e-02 : f32
    %15 = vector.broadcast %cst_10 : f32 to vector<128x1xf32>
    %16 = arith.mulf %12, %15 : vector<128x1xf32>
    %17 = arith.mulf %14, %14 : vector<128x1xf32>
    %18 = arith.subf %16, %17 : vector<128x1xf32>
    %19 = vector.broadcast %14 : vector<128x1xf32> to vector<128x128xf32>
    %20 = arith.subf %5, %19 : vector<128x128xf32>
    %cst_11 = arith.constant 9.99999974E-6 : f32
    %21 = vector.broadcast %cst_11 : f32 to vector<128x1xf32>
    %22 = arith.addf %18, %21 : vector<128x1xf32>
    %23 = math.rsqrt %22 : vector<128x1xf32>
    %24 = vector.broadcast %23 : vector<128x1xf32> to vector<128x128xf32>
    %25 = arith.mulf %20, %24 : vector<128x128xf32>
    %26 = vector.broadcast %6 : vector<1x128xf32> to vector<128x128xf32>
    %27 = arith.mulf %25, %26 : vector<128x128xf32>
    %28 = vector.broadcast %7 : vector<1x128xf32> to vector<128x128xf32>
    %29 = arith.addf %27, %28 : vector<128x128xf32>
    %cst_12 = arith.constant 0.000000e+00 : f32
    %30 = vector.broadcast %cst_12 : f32 to vector<128x128xf32>
    %31 = arith.maximumf %29, %30 : vector<128x128xf32>
    %cst_13 = arith.constant 0.000000e+00 : f32
    %32 = vector.broadcast %cst_13 : f32 to vector<128x128xf32>
    %33 = arith.subf %32, %29 : vector<128x128xf32>
    %cst_14 = arith.constant 0.000000e+00 : f32
    %34 = vector.broadcast %cst_14 : f32 to vector<128x128xf32>
    %35 = arith.maximumf %33, %34 : vector<128x128xf32>
    %36 = tpu.concatenate %31, %35 in 1 : vector<128x128xf32>, vector<128x128xf32> -> vector<128x256xf32>
    %c16 = arith.constant 16 : index
    %c0_15 = arith.constant 0 : index
    %37 = vector.load %arg2[%c16, %c0_15] : memref<784x128xf32, #tpu.memory_space<vmem>>, vector<256x128xf32>
    %cst_16 = arith.constant dense<0.000000e+00> : vector<128x128xf32>
    %38 = tpu.matmul %36, %37, %cst_16 {dimension_numbers = #tpu.dot_dimension_numbers<[1], [0], [0], [1], [0, 0, 1, 1], [], []>} : vector<128x256xf32>, vector<256x128xf32>, vector<128x128xf32> -> vector<128x128xf32>
    %c3 = arith.constant 3 : index
    %c0_17 = arith.constant 0 : index
    %39 = vector.load %arg3[%c3, %c0_17] : memref<10x128xf32, #tpu.memory_space<vmem>>, vector<1x128xf32>
    %40 = vector.broadcast %39 : vector<1x128xf32> to vector<128x128xf32>
    %41 = arith.addf %38, %40 : vector<128x128xf32>
    %c4 = arith.constant 4 : index
    %c0_18 = arith.constant 0 : index
    %42 = vector.load %arg3[%c4, %c0_18] : memref<10x128xf32, #tpu.memory_space<vmem>>, vector<1x128xf32>
    %c5 = arith.constant 5 : index
    %c0_19 = arith.constant 0 : index
    %43 = vector.load %arg3[%c5, %c0_19] : memref<10x128xf32, #tpu.memory_space<vmem>>, vector<1x128xf32>
    %cst_20 = arith.constant dense<0.000000e+00> : vector<128xf32>
    %44 = vector.multi_reduction <add>, %41, %cst_20 [1] : vector<128x128xf32> to vector<128xf32>
    %45 = vector.shape_cast %44 : vector<128xf32> to vector<128x1xf32>
    %46 = arith.mulf %41, %41 : vector<128x128xf32>
    %cst_21 = arith.constant dense<0.000000e+00> : vector<128xf32>
    %47 = vector.multi_reduction <add>, %46, %cst_21 [1] : vector<128x128xf32> to vector<128xf32>
    %48 = vector.shape_cast %47 : vector<128xf32> to vector<128x1xf32>
    %cst_22 = arith.constant 3.125000e-02 : f32
    %49 = vector.broadcast %cst_22 : f32 to vector<128x1xf32>
    %50 = arith.mulf %45, %49 : vector<128x1xf32>
    %cst_23 = arith.constant 3.125000e-02 : f32
    %51 = vector.broadcast %cst_23 : f32 to vector<128x1xf32>
    %52 = arith.mulf %48, %51 : vector<128x1xf32>
    %53 = arith.mulf %50, %50 : vector<128x1xf32>
    %54 = arith.subf %52, %53 : vector<128x1xf32>
    %55 = vector.broadcast %50 : vector<128x1xf32> to vector<128x128xf32>
    %56 = arith.subf %41, %55 : vector<128x128xf32>
    %cst_24 = arith.constant 9.99999974E-6 : f32
    %57 = vector.broadcast %cst_24 : f32 to vector<128x1xf32>
    %58 = arith.addf %54, %57 : vector<128x1xf32>
    %59 = math.rsqrt %58 : vector<128x1xf32>
    %60 = vector.broadcast %59 : vector<128x1xf32> to vector<128x128xf32>
    %61 = arith.mulf %56, %60 : vector<128x128xf32>
    %62 = vector.broadcast %42 : vector<1x128xf32> to vector<128x128xf32>
    %63 = arith.mulf %61, %62 : vector<128x128xf32>
    %64 = vector.broadcast %43 : vector<1x128xf32> to vector<128x128xf32>
    %65 = arith.addf %63, %64 : vector<128x128xf32>
    %cst_25 = arith.constant 0.000000e+00 : f32
    %66 = vector.broadcast %cst_25 : f32 to vector<128x128xf32>
    %67 = arith.maximumf %65, %66 : vector<128x128xf32>
    %cst_26 = arith.constant 0.000000e+00 : f32
    %68 = vector.broadcast %cst_26 : f32 to vector<128x128xf32>
    %69 = arith.subf %68, %65 : vector<128x128xf32>
    %cst_27 = arith.constant 0.000000e+00 : f32
    %70 = vector.broadcast %cst_27 : f32 to vector<128x128xf32>
    %71 = arith.maximumf %69, %70 : vector<128x128xf32>
    %72 = tpu.concatenate %67, %71 in 1 : vector<128x128xf32>, vector<128x128xf32> -> vector<128x256xf32>
    %c272 = arith.constant 272 : index
    %c0_28 = arith.constant 0 : index
    %73 = vector.load %arg2[%c272, %c0_28] : memref<784x128xf32, #tpu.memory_space<vmem>>, vector<256x128xf32>
    %cst_29 = arith.constant dense<0.000000e+00> : vector<128x128xf32>
    %74 = tpu.matmul %72, %73, %cst_29 {dimension_numbers = #tpu.dot_dimension_numbers<[1], [0], [0], [1], [0, 0, 1, 1], [], []>} : vector<128x256xf32>, vector<256x128xf32>, vector<128x128xf32> -> vector<128x128xf32>
    %c6 = arith.constant 6 : index
    %c0_30 = arith.constant 0 : index
    %75 = vector.load %arg3[%c6, %c0_30] : memref<10x128xf32, #tpu.memory_space<vmem>>, vector<1x128xf32>
    %76 = vector.broadcast %75 : vector<1x128xf32> to vector<128x128xf32>
    %77 = arith.addf %74, %76 : vector<128x128xf32>
    %c7 = arith.constant 7 : index
    %c0_31 = arith.constant 0 : index
    %78 = vector.load %arg3[%c7, %c0_31] : memref<10x128xf32, #tpu.memory_space<vmem>>, vector<1x128xf32>
    %c8 = arith.constant 8 : index
    %c0_32 = arith.constant 0 : index
    %79 = vector.load %arg3[%c8, %c0_32] : memref<10x128xf32, #tpu.memory_space<vmem>>, vector<1x128xf32>
    %cst_33 = arith.constant dense<0.000000e+00> : vector<128xf32>
    %80 = vector.multi_reduction <add>, %77, %cst_33 [1] : vector<128x128xf32> to vector<128xf32>
    %81 = vector.shape_cast %80 : vector<128xf32> to vector<128x1xf32>
    %82 = arith.mulf %77, %77 : vector<128x128xf32>
    %cst_34 = arith.constant dense<0.000000e+00> : vector<128xf32>
    %83 = vector.multi_reduction <add>, %82, %cst_34 [1] : vector<128x128xf32> to vector<128xf32>
    %84 = vector.shape_cast %83 : vector<128xf32> to vector<128x1xf32>
    %cst_35 = arith.constant 3.125000e-02 : f32
    %85 = vector.broadcast %cst_35 : f32 to vector<128x1xf32>
    %86 = arith.mulf %81, %85 : vector<128x1xf32>
    %cst_36 = arith.constant 3.125000e-02 : f32
    %87 = vector.broadcast %cst_36 : f32 to vector<128x1xf32>
    %88 = arith.mulf %84, %87 : vector<128x1xf32>
    %89 = arith.mulf %86, %86 : vector<128x1xf32>
    %90 = arith.subf %88, %89 : vector<128x1xf32>
    %91 = vector.broadcast %86 : vector<128x1xf32> to vector<128x128xf32>
    %92 = arith.subf %77, %91 : vector<128x128xf32>
    %cst_37 = arith.constant 9.99999974E-6 : f32
    %93 = vector.broadcast %cst_37 : f32 to vector<128x1xf32>
    %94 = arith.addf %90, %93 : vector<128x1xf32>
    %95 = math.rsqrt %94 : vector<128x1xf32>
    %96 = vector.broadcast %95 : vector<128x1xf32> to vector<128x128xf32>
    %97 = arith.mulf %92, %96 : vector<128x128xf32>
    %98 = vector.broadcast %78 : vector<1x128xf32> to vector<128x128xf32>
    %99 = arith.mulf %97, %98 : vector<128x128xf32>
    %100 = vector.broadcast %79 : vector<1x128xf32> to vector<128x128xf32>
    %101 = arith.addf %99, %100 : vector<128x128xf32>
    %cst_38 = arith.constant 0.000000e+00 : f32
    %102 = vector.broadcast %cst_38 : f32 to vector<128x128xf32>
    %103 = arith.maximumf %101, %102 : vector<128x128xf32>
    %cst_39 = arith.constant 0.000000e+00 : f32
    %104 = vector.broadcast %cst_39 : f32 to vector<128x128xf32>
    %105 = arith.subf %104, %101 : vector<128x128xf32>
    %cst_40 = arith.constant 0.000000e+00 : f32
    %106 = vector.broadcast %cst_40 : f32 to vector<128x128xf32>
    %107 = arith.maximumf %105, %106 : vector<128x128xf32>
    %108 = tpu.concatenate %103, %107 in 1 : vector<128x128xf32>, vector<128x128xf32> -> vector<128x256xf32>
    %c528 = arith.constant 528 : index
    %c0_41 = arith.constant 0 : index
    %109 = vector.load %arg2[%c528, %c0_41] : memref<784x128xf32, #tpu.memory_space<vmem>>, vector<256x128xf32>
    %cst_42 = arith.constant dense<0.000000e+00> : vector<128x128xf32>
    %110 = tpu.matmul %108, %109, %cst_42 {dimension_numbers = #tpu.dot_dimension_numbers<[1], [0], [0], [1], [0, 0, 1, 1], [], []>} : vector<128x256xf32>, vector<256x128xf32>, vector<128x128xf32> -> vector<128x128xf32>
    %c9 = arith.constant 9 : index
    %c0_43 = arith.constant 0 : index
    %111 = vector.load %arg3[%c9, %c0_43] : memref<10x128xf32, #tpu.memory_space<vmem>>, vector<1x128xf32>
    %112 = vector.broadcast %111 : vector<1x128xf32> to vector<128x128xf32>
    %113 = arith.addf %110, %112 : vector<128x128xf32>
    %114 = math.tanh %113 : vector<128x128xf32>
    %c0_44 = arith.constant 0 : index
    %c0_45 = arith.constant 0 : index
    %115 = vector.load %arg4[%c0_44, %c0_45] : memref<128x128xf32, #tpu.memory_space<vmem>>, vector<128x128xf32>
    tpu.vector_store %arg4[%c0_44, %c0_45], %114 {strides = array<i32>} : memref<128x128xf32, #tpu.memory_space<vmem>>, vector<128x128xf32>,
    return
  }
  func.func @transform_0(%arg0: i32) -> (i32, i32) {
    %c0_i32 = arith.constant 0 : i32
    %c0_i32_0 = arith.constant 0 : i32
    return %arg0, %c0_i32 : i32, i32
  }
  func.func @transform_1(%arg0: i32) -> (i32, i32) {
    %c0_i32 = arith.constant 0 : i32
    %c0_i32_0 = arith.constant 0 : i32
    %c0_i32_1 = arith.constant 0 : i32
    return %c0_i32, %c0_i32_0 : i32, i32
  }
  func.func @transform_2(%arg0: i32) -> (i32, i32) {
    %c0_i32 = arith.constant 0 : i32
    %c0_i32_0 = arith.constant 0 : i32
    %c0_i32_1 = arith.constant 0 : i32
    return %c0_i32, %c0_i32_0 : i32, i32
  }
  func.func @transform_3(%arg0: i32) -> (i32, i32) {
    %c0_i32 = arith.constant 0 : i32
    %c0_i32_0 = arith.constant 0 : i32
    return %arg0, %c0_i32 : i32, i32
  }
}

</mosaic_0001>

<llo_original>
// kernel: actor_net_smooth.1
$region0: #{actor_net_smooth.1}
  #allocation0 [shape = 'u32[]', space=smem, size = 0x4, offset = 0x4, fixed_abs, tag = 'smem constant byte address 0x4 - core index']
  #allocation1 [shape = 'u32[144,128]{1,0:T(1,128)}', space=vmem, size = 0x12000, scoped, tag = 'internal scratch']
  %s0 = inlined_call_operand.vmem [shape: f32[256,16], index: 0, kind: input, shape index: {}]
  %s1 = inlined_call_operand.hbm [shape: f32[784,128], index: 1, kind: input, shape index: {}]
  %s2 = inlined_call_operand.vmem [shape: f32[10,128], index: 2, kind: input, shape index: {}]
  %s3 = inlined_call_operand.vmem [shape: f32[256,128], index: 3, kind: output, shape index: {}]
  %s4 = sld [smem:[#allocation0]]
  $region49: #{actor_net_smooth.1} parent=0
    _
  %s6 = ssub.s32 1, %s4
  %s7 = scalar_select 0, %s6, %s4
  $region1: #{actor_net_smooth.1} parent=0
    #allocation2 [shape = 'u8[401408]{0}', space=vmem, size = 0x62000, scoped, tag = 'input window, operand 1, single buffered']
    #allocation3 [shape = 's32[2]{0}', space=sflag, size = 0x8, scoped, tag = 'scoped memory for actor_net_smooth.1']
    %8 = vsyncpa [#allocation3], 0
    loop: start=0, step=1, limit=4
    $region2: #{actor_net_smooth.1} parent=1 // loop_pre_header
      _
    $region3: #{actor_net_smooth.1} parent=1 // loop_header
      %s10 = sphi 0, %s14
      %p11 = scmp.ge.s32.totalorder %s10, 4
      %s20 = sphi 0, %s22
      %s23 = sphi 0, %s20
      %s24 = sphi 0, %s23
      %s40 = sphi 0, %s24
      %s44 = sphi 0, %s44
      %s46 = sphi 0, %s44
      %s47 = sphi 0, %s46
      %s61 = sphi 0, %s47
      %s65 = sphi 0, %s65
      %s67 = sphi 0, %s65
      %s68 = sphi 0, %s67
      %s82 = sphi 0, %s68
      %s88 = sphi 0, %s90
      %s91 = sphi 0, %s88
      %s92 = sphi 0, %s91
      %s108 = sphi 0, %s92
    $region4: #{actor_net_smooth.1} parent=1 // loop_header_branch
      %13 = sbr.rel (%p11) target = $region8
    $region5: #{actor_net_smooth.1} parent=1 // loop_body
      %s15 = ssub.s32 %s10, 1
      %s16 = ssub.s32 %s10, 2
      %s17 = sadd.s32 %s10, 1
      %s18 = ssub.s32 %s10, %s17
      %p19 = scmp.eq.s32.totalorder %s18, 0
      %s21 = sadd.s32 %s20, 1
      %s22 = scalar_select %p19, %s20, %s21
      %p25 = pneg %p19
      %p26 = scmp.eq.s32.totalorder %s10, 1
      %p27 = por %p25, %p26
      %p28 = scmp.ne.s32.totalorder %s20, %s23
      %p29 = scmp.eq.s32.totalorder %s10, 0
      %p30 = por %p28, %p29
      %p31 = scmp.ne.s32.totalorder %s20, %s23
      %p32 = scmp.eq.s32.totalorder %s15, 1
      %p33 = por %p31, %p32
      %p34 = scmp.ne.s32.totalorder %s23, %s24
      %p35 = scmp.eq.s32.totalorder %s15, 0
      %p36 = por %p34, %p35
      %p37 = scmp.ne.s32.totalorder %s23, %s24
      %p38 = scmp.eq.s32.totalorder %s16, 1
      %p39 = por %p37, %p38
      %p41 = scmp.ne.s32.totalorder %s24, %s40
      %p42 = scmp.eq.s32.totalorder %s16, 0
      %p43 = por %p41, %p42
      %s45 = sadd.s32 %s44, 1
      %p48 = scmp.eq.s32.totalorder %s10, 1
      %p49 = scmp.ne.s32.totalorder %s44, %s46
      %p50 = scmp.eq.s32.totalorder %s10, 0
      %p51 = por %p49, %p50
      %p52 = scmp.ne.s32.totalorder %s44, %s46
      %p53 = scmp.eq.s32.totalorder %s15, 1
      %p54 = por %p52, %p53
      %p55 = scmp.ne.s32.totalorder %s46, %s47
      %p56 = scmp.eq.s32.totalorder %s15, 0
      %p57 = por %p55, %p56
      %p58 = scmp.ne.s32.totalorder %s46, %s47
      %p59 = scmp.eq.s32.totalorder %s16, 1
      %p60 = por %p58, %p59
      %p62 = scmp.ne.s32.totalorder %s47, %s61
      %p63 = scmp.eq.s32.totalorder %s16, 0
      %p64 = por %p62, %p63
      %s66 = sadd.s32 %s65, 1
      %p69 = scmp.eq.s32.totalorder %s10, 1
      %p70 = scmp.ne.s32.totalorder %s65, %s67
      %p71 = scmp.eq.s32.totalorder %s10, 0
      %p72 = por %p70, %p71
      %p73 = scmp.ne.s32.totalorder %s65, %s67
      %p74 = scmp.eq.s32.totalorder %s15, 1
      %p75 = por %p73, %p74
      %p76 = scmp.ne.s32.totalorder %s67, %s68
      %p77 = scmp.eq.s32.totalorder %s15, 0
      %p78 = por %p76, %p77
      %p79 = scmp.ne.s32.totalorder %s67, %s68
      %p80 = scmp.eq.s32.totalorder %s16, 1
      %p81 = por %p79, %p80
      %p83 = scmp.ne.s32.totalorder %s68, %s82
      %p84 = scmp.eq.s32.totalorder %s16, 0
      %p85 = por %p83, %p84
      %s86 = ssub.s32 %s10, %s17
      %p87 = scmp.eq.s32.totalorder %s86, 0
      %s89 = sadd.s32 %s88, 1
      %s90 = scalar_select %p87, %s88, %s89
      %p93 = pneg %p87
      %p94 = scmp.eq.s32.totalorder %s10, 1
      %p95 = por %p93, %p94
      %p96 = scmp.ne.s32.totalorder %s88, %s91
      %p97 = scmp.eq.s32.totalorder %s10, 0
      %p98 = por %p96, %p97
      %p99 = scmp.ne.s32.totalorder %s88, %s91
      %p100 = scmp.eq.s32.totalorder %s15, 1
      %p101 = por %p99, %p100
      %p102 = scmp.ne.s32.totalorder %s91, %s92
      %p103 = scmp.eq.s32.totalorder %s15, 0
      %p104 = por %p102, %p103
      %p105 = scmp.ne.s32.totalorder %s91, %s92
      %p106 = scmp.eq.s32.totalorder %s16, 1
      %p107 = por %p105, %p106
      %p109 = scmp.ne.s32.totalorder %s92, %s108
      %p110 = scmp.eq.s32.totalorder %s16, 0
      %p111 = por %p109, %p110
      %p112 = scmp.le.s32.totalorder 1, %s10
      %p113 = scmp.lt.s32.totalorder %s10, 3
      %p114 = pnand %p112, %p113
      %p115 = pneg %p114
      // Predicated region
      $region9: #{actor_net_smooth.1} parent=5 // pred_check
        _
      $region10: #{actor_net_smooth.1} parent=5 // pred_check_branch
        %117 = sbr.rel (%p114) target = $region12
      $region11: #{actor_net_smooth.1} parent=5 // pred_region
        %s118 = ssub.s32 %s10, 1
        // Predicated region
        $region13: #{actor_net_smooth.1} parent=11 // pred_check
          %p119 = pneg %p57
        $region14: #{actor_net_smooth.1} parent=11 // pred_check_branch
          %121 = sbr.rel (%p119) target = $region16
        $region15: #{actor_net_smooth.1} parent=11 // pred_region
          %s123 = ssub.s32 12544, 12544
          %124 = vsyncadd [#allocation3], %s123
          %s125 = sshll.u32 [#allocation2], 4
          %s126 = int_to_ptr.vmem [resolvable:$true] %s125
          %131 = dma.hbm_to_vmem [thread:$0]  %s1, 12544, %s126, [#allocation3], 128, 128, 8
        $region16: #{actor_net_smooth.1} parent=11 // pred_fallthru
          _
        // Predicated region
        $region17: #{actor_net_smooth.1} parent=11 // pred_check
          %p132 = pneg %p78
        $region18: #{actor_net_smooth.1} parent=11 // pred_check_branch
          %134 = sbr.rel (%p132) target = $region20
        $region19: #{actor_net_smooth.1} parent=11 // pred_region
          _
        $region20: #{actor_net_smooth.1} parent=11 // pred_fallthru
          _
      $region12: #{actor_net_smooth.1} parent=5 // pred_fallthru
        _
      %p135 = scmp.lt.s32.totalorder %s10, 2
      // Predicated region
      $region21: #{actor_net_smooth.1} parent=5 // pred_check
        %p136 = pneg %p135
      $region22: #{actor_net_smooth.1} parent=5 // pred_check_branch
        %138 = sbr.rel (%p136) target = $region24
      $region23: #{actor_net_smooth.1} parent=5 // pred_region
        // Predicated region
        $region25: #{actor_net_smooth.1} parent=23 // pred_check
          %p139 = pneg %p30
        $region26: #{actor_net_smooth.1} parent=23 // pred_check_branch
          %141 = sbr.rel (%p139) target = $region28
        $region27: #{actor_net_smooth.1} parent=23 // pred_region
          %s142 = smul.u32 16, %s10
          %p143 = scmp.lt.s32.totalorder %s142, 31
          %s144 = scalar_select %p143, %s142, 31
          %s145 = smul.addr %s144, 8
          %s146 = scalar_lea.vmem %s0, %s145
          %s147 = smul.u32 16, %s10
        $region28: #{actor_net_smooth.1} parent=23 // pred_fallthru
          _
      $region24: #{actor_net_smooth.1} parent=5 // pred_fallthru
        _
      %p148 = scmp.le.s32.totalorder 1, %s10
      %p149 = scmp.lt.s32.totalorder %s10, 3
      %p150 = pnand %p148, %p149
      %p151 = pneg %p150
      // Predicated region
      $region29: #{actor_net_smooth.1} parent=5 // pred_check
        _
      $region30: #{actor_net_smooth.1} parent=5 // pred_check_branch
        %153 = sbr.rel (%p150) target = $region32
      $region31: #{actor_net_smooth.1} parent=5 // pred_region
        %s154 = ssub.s32 %s10, 1
        // Predicated region
        $region33: #{actor_net_smooth.1} parent=31 // pred_check
          %p155 = pneg %p57
        $region34: #{actor_net_smooth.1} parent=31 // pred_check_branch
          %157 = sbr.rel (%p155) target = $region36
        $region35: #{actor_net_smooth.1} parent=31 // pred_region
          %158 = dma.done [#allocation3], 12544
        $region36: #{actor_net_smooth.1} parent=31 // pred_fallthru
          _
        %s159 = smul.u32 16, %s15
        %p160 = scmp.lt.s32.totalorder %s159, 31
        %s161 = scalar_select %p160, %s159, 31
        %s162 = smul.addr %s161, 8
        %s163 = scalar_lea.vmem %s0, %s162
        %p164 = pneg %p36
        %p165 = pneg %p33
        %p166 = pneg %p57
        %p167 = pneg %p54
        %p168 = pneg %p78
        %p169 = pneg %p75
        %p170 = pneg %p104
        %p171 = pneg %p101
        %s172 = smul.u32 16, %s15
        %p173 = scmp.lt.s32.totalorder %s172, 31
        %s174 = scalar_select %p173, %s172, 31
        %s175 = smul.addr %s174, 8
        %s176 = scalar_lea.vmem %s3, %s175
        %s177 = smul.u32 16, %s15
        %p178 = scmp.lt.s32.totalorder %s177, 31
        %s179 = scalar_select %p178, %s177, 31
        %s180 = smul.addr %s179, 8
        %s181 = scalar_lea.vmem %s0, %s180
        %s182 = smul.u32 16, %s15
        %s183 = smul.u32 16, %s15
        %p184 = scmp.lt.s32.totalorder %s183, 31
        %s185 = scalar_select %p184, %s183, 31
        %s186 = smul.addr %s185, 8
        %s187 = scalar_lea.vmem %s3, %s186
        %s188 = smul.u32 16, %s15
        %v189 = vld [vmem:[%s181] sm:$0xff]
        %v190 = vld [vmem:[%s181 + $0x8] sm:$0xff]
        %v191 = vld [vmem:[%s181 + $0x10] sm:$0xff]
        %v192 = vld [vmem:[%s181 + $0x18] sm:$0xff]
        %v193 = vld [vmem:[%s181 + $0x20] sm:$0xff]
        %v194 = vld [vmem:[%s181 + $0x28] sm:$0xff]
        %v195 = vld [vmem:[%s181 + $0x30] sm:$0xff]
        %v196 = vld [vmem:[%s181 + $0x38] sm:$0xff]
        %v197 = vld [vmem:[%s181 + $0x40] sm:$0xff]
        %v198 = vld [vmem:[%s181 + $0x48] sm:$0xff]
        %v199 = vld [vmem:[%s181 + $0x50] sm:$0xff]
        %v200 = vld [vmem:[%s181 + $0x58] sm:$0xff]
        %v201 = vld [vmem:[%s181 + $0x60] sm:$0xff]
        %v202 = vld [vmem:[%s181 + $0x68] sm:$0xff]
        %v203 = vld [vmem:[%s181 + $0x70] sm:$0xff]
        %v204 = vld [vmem:[%s181 + $0x78] sm:$0xff]
        %v205 = vld [vmem:[#allocation2] sm:$0xff]
        %v206 = vld [vmem:[#allocation2 + $0x8] sm:$0xff]
        %v207 = vld [vmem:[%s2] sm:$0x1]
        %v208 = vlaneseq
        %v209 = vshrl.u32 %v208, 7
        %v210 = vsub.s32 0, %v209
        %v211 = vrot.slane %v207, %v210
        %vm212 = vcmask 130048
        %v214 = vsel %vm212, %v189, 0
        %v217 = vsel %vm212, %v190, 0
        %v220 = vsel %vm212, %v191, 0
        %v223 = vsel %vm212, %v192, 0
        %v226 = vsel %vm212, %v193, 0
        %v229 = vsel %vm212, %v194, 0
        %v232 = vsel %vm212, %v195, 0
        %v235 = vsel %vm212, %v196, 0
        %v238 = vsel %vm212, %v197, 0
        %v241 = vsel %vm212, %v198, 0
        %v244 = vsel %vm212, %v199, 0
        %v247 = vsel %vm212, %v200, 0
        %v250 = vsel %vm212, %v201, 0
        %v253 = vsel %vm212, %v202, 0
        %v256 = vsel %vm212, %v203, 0
        %v259 = vsel %vm212, %v204, 0
        %261 = vmatprep.subr.mxu0 0.0
        %262 = vmatpush1.msra.mxu0 0.0
        %263 = vmatprep.subr.mxu0 0.0
        %264 = vmatpush1.msra.mxu0 0.0
        %265 = vmatprep.subr.mxu0 0.0
        %266 = vmatpush1.msra.mxu0 0.0
        %267 = vmatprep.subr.mxu0 0.0
        %268 = vmatpush1.msra.mxu0 0.0
        %269 = vmatprep.subr.mxu0 0.0
        %270 = vmatpush1.msra.mxu0 0.0
        %271 = vmatprep.subr.mxu0 0.0
        %272 = vmatpush1.msra.mxu0 0.0
        %273 = vmatprep.subr.mxu0 0.0
        %274 = vmatpush1.msra.mxu0 0.0
        %275 = vmatprep.subr.mxu0 0.0
        %276 = vmatpush1.msra.mxu0 0.0
        %277 = vmatprep.subr.mxu0 0.0
        %278 = vmatpush1.msra.mxu0 0.0
        %279 = vmatprep.subr.mxu0 0.0
        %280 = vmatpush1.msra.mxu0 0.0
        %281 = vmatprep.subr.mxu0 0.0
        %282 = vmatpush1.msra.mxu0 0.0
        %283 = vmatprep.subr.mxu0 0.0
        %284 = vmatpush1.msra.mxu0 0.0
        %285 = vmatprep.subr.mxu0 0.0
        %286 = vmatpush1.msra.mxu0 0.0
        %287 = vmatprep.subr.mxu0 0.0
        %288 = vmatpush1.msra.mxu0 0.0
        %289 = vmatprep.subr.mxu0 0.0
        %290 = vmatpush1.msra.mxu0 %v206
        %291 = vmatprep.subr.mxu0 0.0
        %292 = vmatpush1.msra.mxu0 %v205
        %293 = vmatprep.subr.mxu0 0.0
        %294 = vmatpush2.msra.mxu0 0.0
        %295 = vmatprep.subr.mxu0 0.0
        %296 = vmatpush2.msra.mxu0 0.0
        %297 = vmatprep.subr.mxu0 0.0
        %298 = vmatpush2.msra.mxu0 0.0
        %299 = vmatprep.subr.mxu0 0.0
        %300 = vmatpush2.msra.mxu0 0.0
        %301 = vmatprep.subr.mxu0 0.0
        %302 = vmatpush2.msra.mxu0 0.0
        %303 = vmatprep.subr.mxu0 0.0
        %304 = vmatpush2.msra.mxu0 0.0
        %305 = vmatprep.subr.mxu0 0.0
        %306 = vmatpush2.msra.mxu0 0.0
        %307 = vmatprep.subr.mxu0 0.0
        %308 = vmatpush2.msra.mxu0 0.0
        %309 = vmatprep.subr.mxu0 0.0
        %310 = vmatpush2.msra.mxu0 0.0
        %311 = vmatprep.subr.mxu0 0.0
        %312 = vmatpush2.msra.mxu0 0.0
        %313 = vmatprep.subr.mxu0 0.0
        %314 = vmatpush2.msra.mxu0 0.0
        %315 = vmatprep.subr.mxu0 0.0
        %316 = vmatpush2.msra.mxu0 0.0
        %317 = vmatprep.subr.mxu0 0.0
        %318 = vmatpush2.msra.mxu0 0.0
        %319 = vmatprep.subr.mxu0 0.0
        %320 = vmatpush2.msra.mxu0 0.0
        %321 = vmatprep.subr.mxu0 0.0
        %322 = vmatpush2.msra.mxu0 0.0
        %323 = vmatprep.subr.mxu0 0.0
        %324 = vmatpush2.msra.mxu0 0.0
        %325 = vmatprep.mubr.f32.mxu0 0.0
        %326 = vmatmul.mubr.f32.gmra.mxu0 %v214
        %v327 = vpop.f32.mrf.mxu0
        %v328 = vadd.f32 %v211, %v327
        %v329 = vpop.f32.mrf.mxu0
        %330 = vmatprep.mubr.f32.mxu0 0.0
        %331 = vmatmul.mubr.f32.gmra.mxu0 %v217
        %v332 = vpop.f32.mrf.mxu0
        %v333 = vadd.f32 %v211, %v332
        %v334 = vpop.f32.mrf.mxu0
        %335 = vmatprep.mubr.f32.mxu0 0.0
        %336 = vmatmul.mubr.f32.gmra.mxu0 %v220
        %v337 = vpop.f32.mrf.mxu0
        %v338 = vadd.f32 %v211, %v337
        %v339 = vpop.f32.mrf.mxu0
        %340 = vmatprep.mubr.f32.mxu0 0.0
        %341 = vmatmul.mubr.f32.gmra.mxu0 %v223
        %v342 = vpop.f32.mrf.mxu0
        %v343 = vadd.f32 %v211, %v342
        %v344 = vpop.f32.mrf.mxu0
        %345 = vmatprep.mubr.f32.mxu0 0.0
        %346 = vmatmul.mubr.f32.gmra.mxu0 %v226
        %v347 = vpop.f32.mrf.mxu0
        %v348 = vadd.f32 %v211, %v347
        %v349 = vpop.f32.mrf.mxu0
        %350 = vmatprep.mubr.f32.mxu0 0.0
        %351 = vmatmul.mubr.f32.gmra.mxu0 %v229
        %v352 = vpop.f32.mrf.mxu0
        %v353 = vadd.f32 %v211, %v352
        %v354 = vpop.f32.mrf.mxu0
        %355 = vmatprep.mubr.f32.mxu0 0.0
        %356 = vmatmul.mubr.f32.gmra.mxu0 %v232
        %v357 = vpop.f32.mrf.mxu0
        %v358 = vadd.f32 %v211, %v357
        %v359 = vpop.f32.mrf.mxu0
        %360 = vmatprep.mubr.f32.mxu0 0.0
        %361 = vmatmul.mubr.f32.gmra.mxu0 %v235
        %v362 = vpop.f32.mrf.mxu0
        %v363 = vadd.f32 %v211, %v362
        %v364 = vpop.f32.mrf.mxu0
        %365 = vmatprep.mubr.f32.mxu0 0.0
        %366 = vmatmul.mubr.f32.gmra.mxu0 %v238
        %v367 = vpop.f32.mrf.mxu0
        %v368 = vadd.f32 %v211, %v367
        %v369 = vpop.f32.mrf.mxu0
        %370 = vmatprep.mubr.f32.mxu0 0.0
        %371 = vmatmul.mubr.f32.gmra.mxu0 %v241
        %v372 = vpop.f32.mrf.mxu0
        %v373 = vadd.f32 %v211, %v372
        %v374 = vpop.f32.mrf.mxu0
        %375 = vmatprep.mubr.f32.mxu0 0.0
        %376 = vmatmul.mubr.f32.gmra.mxu0 %v244
        %v377 = vpop.f32.mrf.mxu0
        %v378 = vadd.f32 %v211, %v377
        %v379 = vpop.f32.mrf.mxu0
        %380 = vmatprep.mubr.f32.mxu0 0.0
        %381 = vmatmul.mubr.f32.gmra.mxu0 %v247
        %v382 = vpop.f32.mrf.mxu0
        %v383 = vadd.f32 %v211, %v382
        %v384 = vpop.f32.mrf.mxu0
        %385 = vmatprep.mubr.f32.mxu0 0.0
        %386 = vmatmul.mubr.f32.gmra.mxu0 %v250
        %v387 = vpop.f32.mrf.mxu0
        %v388 = vadd.f32 %v211, %v387
        %v389 = vpop.f32.mrf.mxu0
        %390 = vmatprep.mubr.f32.mxu0 0.0
        %391 = vmatmul.mubr.f32.gmra.mxu0 %v253
        %v392 = vpop.f32.mrf.mxu0
        %v393 = vadd.f32 %v211, %v392
        %v394 = vpop.f32.mrf.mxu0
        %395 = vmatprep.mubr.f32.mxu0 0.0
        %396 = vmatmul.mubr.f32.gmra.mxu0 %v256
        %v397 = vpop.f32.mrf.mxu0
        %v398 = vadd.f32 %v211, %v397
        %v399 = vpop.f32.mrf.mxu0
        %400 = vmatprep.mubr.f32.mxu0 0.0
        %401 = vmatmul.mubr.f32.gmra.mxu0 %v259
        %v402 = vpop.f32.mrf.mxu0
        %v403 = vadd.f32 %v211, %v402
        %v404 = vpop.f32.mrf.mxu0
        %405 = vdwg.mxu0
        %v406 = vld [vmem:[%s2 + $0x1] sm:$0x1]
        %v407 = vld [vmem:[%s2 + $0x2] sm:$0x1]
        %408 = vadd.xlane.f32.xlu0 %v328
        %v409 = vpop.xlane.xlu0 %408
        %410 = vadd.xlane.f32.xlu0 %v333
        %v411 = vpop.xlane.xlu0 %410
        %412 = vadd.xlane.f32.xlu0 %v338
        %v413 = vpop.xlane.xlu0 %412
        %414 = vadd.xlane.f32.xlu0 %v343
        %v415 = vpop.xlane.xlu0 %414
        %416 = vadd.xlane.f32.xlu0 %v348
        %v417 = vpop.xlane.xlu0 %416
        %418 = vadd.xlane.f32.xlu0 %v353
        %v419 = vpop.xlane.xlu0 %418
        %420 = vadd.xlane.f32.xlu0 %v358
        %v421 = vpop.xlane.xlu0 %420
        %422 = vadd.xlane.f32.xlu0 %v363
        %v423 = vpop.xlane.xlu0 %422
        %424 = vadd.xlane.f32.xlu0 %v368
        %v425 = vpop.xlane.xlu0 %424
        %426 = vadd.xlane.f32.xlu0 %v373
        %v427 = vpop.xlane.xlu0 %426
        %428 = vadd.xlane.f32.xlu0 %v378
        %v429 = vpop.xlane.xlu0 %428
        %430 = vadd.xlane.f32.xlu0 %v383
        %v431 = vpop.xlane.xlu0 %430
        %432 = vadd.xlane.f32.xlu0 %v388
        %v433 = vpop.xlane.xlu0 %432
        %434 = vadd.xlane.f32.xlu0 %v393
        %v435 = vpop.xlane.xlu0 %434
        %436 = vadd.xlane.f32.xlu0 %v398
        %v437 = vpop.xlane.xlu0 %436
        %438 = vadd.xlane.f32.xlu0 %v403
        %v439 = vpop.xlane.xlu0 %438
        %v440 = vmul.f32 %v328, %v328
        %v441 = vmul.f32 %v333, %v333
        %v442 = vmul.f32 %v338, %v338
        %v443 = vmul.f32 %v343, %v343
        %v444 = vmul.f32 %v348, %v348
        %v445 = vmul.f32 %v353, %v353
        %v446 = vmul.f32 %v358, %v358
        %v447 = vmul.f32 %v363, %v363
        %v448 = vmul.f32 %v368, %v368
        %v449 = vmul.f32 %v373, %v373
        %v450 = vmul.f32 %v378, %v378
        %v451 = vmul.f32 %v383, %v383
        %v452 = vmul.f32 %v388, %v388
        %v453 = vmul.f32 %v393, %v393
        %v454 = vmul.f32 %v398, %v398
        %v455 = vmul.f32 %v403, %v403
        %456 = vadd.xlane.f32.xlu0 %v440
        %v457 = vpop.xlane.xlu0 %456
        %458 = vadd.xlane.f32.xlu0 %v441
        %v459 = vpop.xlane.xlu0 %458
        %460 = vadd.xlane.f32.xlu0 %v442
        %v461 = vpop.xlane.xlu0 %460
        %462 = vadd.xlane.f32.xlu0 %v443
        %v463 = vpop.xlane.xlu0 %462
        %464 = vadd.xlane.f32.xlu0 %v444
        %v465 = vpop.xlane.xlu0 %464
        %466 = vadd.xlane.f32.xlu0 %v445
        %v467 = vpop.xlane.xlu0 %466
        %468 = vadd.xlane.f32.xlu0 %v446
        %v469 = vpop.xlane.xlu0 %468
        %470 = vadd.xlane.f32.xlu0 %v447
        %v471 = vpop.xlane.xlu0 %470
        %472 = vadd.xlane.f32.xlu0 %v448
        %v473 = vpop.xlane.xlu0 %472
        %474 = vadd.xlane.f32.xlu0 %v449
        %v475 = vpop.xlane.xlu0 %474
        %476 = vadd.xlane.f32.xlu0 %v450
        %v477 = vpop.xlane.xlu0 %476
        %478 = vadd.xlane.f32.xlu0 %v451
        %v479 = vpop.xlane.xlu0 %478
        %480 = vadd.xlane.f32.xlu0 %v452
        %v481 = vpop.xlane.xlu0 %480
        %482 = vadd.xlane.f32.xlu0 %v453
        %v483 = vpop.xlane.xlu0 %482
        %484 = vadd.xlane.f32.xlu0 %v454
        %v485 = vpop.xlane.xlu0 %484
        %486 = vadd.xlane.f32.xlu0 %v455
        %v487 = vpop.xlane.xlu0 %486
        %v488 = vmul.f32 %v409, 0.03125
        %v489 = vmul.f32 %v411, 0.03125
        %v490 = vmul.f32 %v413, 0.03125
        %v491 = vmul.f32 %v415, 0.03125
        %v492 = vmul.f32 %v417, 0.03125
        %v493 = vmul.f32 %v419, 0.03125
        %v494 = vmul.f32 %v421, 0.03125
        %v495 = vmul.f32 %v423, 0.03125
        %v496 = vmul.f32 %v425, 0.03125
        %v497 = vmul.f32 %v427, 0.03125
        %v498 = vmul.f32 %v429, 0.03125
        %v499 = vmul.f32 %v431, 0.03125
        %v500 = vmul.f32 %v433, 0.03125
        %v501 = vmul.f32 %v435, 0.03125
        %v502 = vmul.f32 %v437, 0.03125
        %v503 = vmul.f32 %v439, 0.03125
        %v504 = vmul.f32 %v457, 0.03125
        %v505 = vmul.f32 %v459, 0.03125
        %v506 = vmul.f32 %v461, 0.03125
        %v507 = vmul.f32 %v463, 0.03125
        %v508 = vmul.f32 %v465, 0.03125
        %v509 = vmul.f32 %v467, 0.03125
        %v510 = vmul.f32 %v469, 0.03125
        %v511 = vmul.f32 %v471, 0.03125
        %v512 = vmul.f32 %v473, 0.03125
        %v513 = vmul.f32 %v475, 0.03125
        %v514 = vmul.f32 %v477, 0.03125
        %v515 = vmul.f32 %v479, 0.03125
        %v516 = vmul.f32 %v481, 0.03125
        %v517 = vmul.f32 %v483, 0.03125
        %v518 = vmul.f32 %v485, 0.03125
        %v519 = vmul.f32 %v487, 0.03125
        %v520 = vmul.f32 %v488, %v488
        %v521 = vmul.f32 %v489, %v489
        %v522 = vmul.f32 %v490, %v490
        %v523 = vmul.f32 %v491, %v491
        %v524 = vmul.f32 %v492, %v492
        %v525 = vmul.f32 %v493, %v493
        %v526 = vmul.f32 %v494, %v494
        %v527 = vmul.f32 %v495, %v495
        %v528 = vmul.f32 %v496, %v496
        %v529 = vmul.f32 %v497, %v497
        %v530 = vmul.f32 %v498, %v498
        %v531 = vmul.f32 %v499, %v499
        %v532 = vmul.f32 %v500, %v500
        %v533 = vmul.f32 %v501, %v501
        %v534 = vmul.f32 %v502, %v502
        %v535 = vmul.f32 %v503, %v503
        %v536 = vsub.f32 %v504, %v520
        %v537 = vsub.f32 %v505, %v521
        %v538 = vsub.f32 %v506, %v522
        %v539 = vsub.f32 %v507, %v523
        %v540 = vsub.f32 %v508, %v524
        %v541 = vsub.f32 %v509, %v525
        %v542 = vsub.f32 %v510, %v526
        %v543 = vsub.f32 %v511, %v527
        %v544 = vsub.f32 %v512, %v528
        %v545 = vsub.f32 %v513, %v529
        %v546 = vsub.f32 %v514, %v530
        %v547 = vsub.f32 %v515, %v531
        %v548 = vsub.f32 %v516, %v532
        %v549 = vsub.f32 %v517, %v533
        %v550 = vsub.f32 %v518, %v534
        %v551 = vsub.f32 %v519, %v535
        %v552 = vsub.f32 %v328, %v488
        %v553 = vsub.f32 %v333, %v489
        %v554 = vsub.f32 %v338, %v490
        %v555 = vsub.f32 %v343, %v491
        %v556 = vsub.f32 %v348, %v492
        %v557 = vsub.f32 %v353, %v493
        %v558 = vsub.f32 %v358, %v494
        %v559 = vsub.f32 %v363, %v495
        %v560 = vsub.f32 %v368, %v496
        %v561 = vsub.f32 %v373, %v497
        %v562 = vsub.f32 %v378, %v498
        %v563 = vsub.f32 %v383, %v499
        %v564 = vsub.f32 %v388, %v500
        %v565 = vsub.f32 %v393, %v501
        %v566 = vsub.f32 %v398, %v502
        %v567 = vsub.f32 %v403, %v503
        %v568 = vadd.f32 %v536, 1e-05
        %v569 = vadd.f32 %v537, 1e-05
        %v570 = vadd.f32 %v538, 1e-05
        %v571 = vadd.f32 %v539, 1e-05
        %v572 = vadd.f32 %v540, 1e-05
        %v573 = vadd.f32 %v541, 1e-05
        %v574 = vadd.f32 %v542, 1e-05
        %v575 = vadd.f32 %v543, 1e-05
        %v576 = vadd.f32 %v544, 1e-05
        %v577 = vadd.f32 %v545, 1e-05
        %v578 = vadd.f32 %v546, 1e-05
        %v579 = vadd.f32 %v547, 1e-05
        %v580 = vadd.f32 %v548, 1e-05
        %v581 = vadd.f32 %v549, 1e-05
        %v582 = vadd.f32 %v550, 1e-05
        %v583 = vadd.f32 %v551, 1e-05
        %v584 = vrsqrt.pop %v568
        %v585 = vrsqrt.pop %v569
        %v586 = vrsqrt.pop %v570
        %v587 = vrsqrt.pop %v571
        %v588 = vrsqrt.pop %v572
        %v589 = vrsqrt.pop %v573
        %v590 = vrsqrt.pop %v574
        %v591 = vrsqrt.pop %v575
        %v592 = vrsqrt.pop %v576
        %v593 = vrsqrt.pop %v577
        %v594 = vrsqrt.pop %v578
        %v595 = vrsqrt.pop %v579
        %v596 = vrsqrt.pop %v580
        %v597 = vrsqrt.pop %v581
        %v598 = vrsqrt.pop %v582
        %v599 = vrsqrt.pop %v583
        %v600 = vmul.f32 %v552, %v584
        %v601 = vmul.f32 %v553, %v585
        %v602 = vmul.f32 %v554, %v586
        %v603 = vmul.f32 %v555, %v587
        %v604 = vmul.f32 %v556, %v588
        %v605 = vmul.f32 %v557, %v589
        %v606 = vmul.f32 %v558, %v590
        %v607 = vmul.f32 %v559, %v591
        %v608 = vmul.f32 %v560, %v592
        %v609 = vmul.f32 %v561, %v593
        %v610 = vmul.f32 %v562, %v594
        %v611 = vmul.f32 %v563, %v595
        %v612 = vmul.f32 %v564, %v596
        %v613 = vmul.f32 %v565, %v597
        %v614 = vmul.f32 %v566, %v598
        %v615 = vmul.f32 %v567, %v599
        %v616 = vlaneseq
        %v617 = vshrl.u32 %v616, 7
        %v618 = vsub.s32 0, %v617
        %v619 = vrot.slane %v406, %v618
        %v620 = vmul.f32 %v600, %v619
        %v621 = vmul.f32 %v601, %v619
        %v622 = vmul.f32 %v602, %v619
        %v623 = vmul.f32 %v603, %v619
        %v624 = vmul.f32 %v604, %v619
        %v625 = vmul.f32 %v605, %v619
        %v626 = vmul.f32 %v606, %v619
        %v627 = vmul.f32 %v607, %v619
        %v628 = vmul.f32 %v608, %v619
        %v629 = vmul.f32 %v609, %v619
        %v630 = vmul.f32 %v610, %v619
        %v631 = vmul.f32 %v611, %v619
        %v632 = vmul.f32 %v612, %v619
        %v633 = vmul.f32 %v613, %v619
        %v634 = vmul.f32 %v614, %v619
        %v635 = vmul.f32 %v615, %v619
        %v636 = vlaneseq
        %v637 = vshrl.u32 %v636, 7
        %v638 = vsub.s32 0, %v637
        %v639 = vrot.slane %v407, %v638
        %v640 = vadd.f32 %v620, %v639
        %v641 = vadd.f32 %v621, %v639
        %v642 = vadd.f32 %v622, %v639
        %v643 = vadd.f32 %v623, %v639
        %v644 = vadd.f32 %v624, %v639
        %v645 = vadd.f32 %v625, %v639
        %v646 = vadd.f32 %v626, %v639
        %v647 = vadd.f32 %v627, %v639
        %v648 = vadd.f32 %v628, %v639
        %v649 = vadd.f32 %v629, %v639
        %v650 = vadd.f32 %v630, %v639
        %v651 = vadd.f32 %v631, %v639
        %v652 = vadd.f32 %v632, %v639
        %v653 = vadd.f32 %v633, %v639
        %v654 = vadd.f32 %v634, %v639
        %v655 = vadd.f32 %v635, %v639
        %v656 = vmax.f32 %v640, 0.0
        %v657 = vmax.f32 %v641, 0.0
        %v658 = vmax.f32 %v642, 0.0
        %v659 = vmax.f32 %v643, 0.0
        %v660 = vmax.f32 %v644, 0.0
        %v661 = vmax.f32 %v645, 0.0
        %v662 = vmax.f32 %v646, 0.0
        %v663 = vmax.f32 %v647, 0.0
        %v664 = vmax.f32 %v648, 0.0
        %v665 = vmax.f32 %v649, 0.0
        %v666 = vmax.f32 %v650, 0.0
        %v667 = vmax.f32 %v651, 0.0
        %v668 = vmax.f32 %v652, 0.0
        %v669 = vmax.f32 %v653, 0.0
        %v670 = vmax.f32 %v654, 0.0
        %v671 = vmax.f32 %v655, 0.0
        %v672 = vsub.f32 0.0, %v640
        %v673 = vsub.f32 0.0, %v641
        %v674 = vsub.f32 0.0, %v642
        %v675 = vsub.f32 0.0, %v643
        %v676 = vsub.f32 0.0, %v644
        %v677 = vsub.f32 0.0, %v645
        %v678 = vsub.f32 0.0, %v646
        %v679 = vsub.f32 0.0, %v647
        %v680 = vsub.f32 0.0, %v648
        %v681 = vsub.f32 0.0, %v649
        %v682 = vsub.f32 0.0, %v650
        %v683 = vsub.f32 0.0, %v651
        %v684 = vsub.f32 0.0, %v652
        %v685 = vsub.f32 0.0, %v653
        %v686 = vsub.f32 0.0, %v654
        %v687 = vsub.f32 0.0, %v655
        %v688 = vmax.f32 %v672, 0.0
        %v689 = vmax.f32 %v673, 0.0
        %v690 = vmax.f32 %v674, 0.0
        %v691 = vmax.f32 %v675, 0.0
        %v692 = vmax.f32 %v676, 0.0
        %v693 = vmax.f32 %v677, 0.0
        %v694 = vmax.f32 %v678, 0.0
        %v695 = vmax.f32 %v679, 0.0
        %v696 = vmax.f32 %v680, 0.0
        %v697 = vmax.f32 %v681, 0.0
        %v698 = vmax.f32 %v682, 0.0
        %v699 = vmax.f32 %v683, 0.0
        %v700 = vmax.f32 %v684, 0.0
        %v701 = vmax.f32 %v685, 0.0
        %v702 = vmax.f32 %v686, 0.0
        %v703 = vmax.f32 %v687, 0.0
        %v704 = vld [vmem:[#allocation2 + $0x10] sm:$0xff]
        %v705 = vld [vmem:[#allocation2 + $0x18] sm:$0xff]
        %v706 = vld [vmem:[#allocation2 + $0x20] sm:$0xff]
        %v707 = vld [vmem:[#allocation2 + $0x28] sm:$0xff]
        %v708 = vld [vmem:[#allocation2 + $0x30] sm:$0xff]
        %v709 = vld [vmem:[#allocation2 + $0x38] sm:$0xff]
        %v710 = vld [vmem:[#allocation2 + $0x40] sm:$0xff]
        %v711 = vld [vmem:[#allocation2 + $0x48] sm:$0xff]
        %v712 = vld [vmem:[#allocation2 + $0x50] sm:$0xff]
        %v713 = vld [vmem:[#allocation2 + $0x58] sm:$0xff]
        %v714 = vld [vmem:[#allocation2 + $0x60] sm:$0xff]
        %v715 = vld [vmem:[#allocation2 + $0x68] sm:$0xff]
        %v716 = vld [vmem:[#allocation2 + $0x70] sm:$0xff]
        %v717 = vld [vmem:[#allocation2 + $0x78] sm:$0xff]
        %v718 = vld [vmem:[#allocation2 + $0x80] sm:$0xff]
        %v719 = vld [vmem:[#allocation2 + $0x88] sm:$0xff]
        %v720 = vld [vmem:[#allocation2 + $0x90] sm:$0xff]
        %v721 = vld [vmem:[#allocation2 + $0x98] sm:$0xff]
        %v722 = vld [vmem:[#allocation2 + $0xa0] sm:$0xff]
        %v723 = vld [vmem:[#allocation2 + $0xa8] sm:$0xff]
        %v724 = vld [vmem:[#allocation2 + $0xb0] sm:$0xff]
        %v725 = vld [vmem:[#allocation2 + $0xb8] sm:$0xff]
        %v726 = vld [vmem:[#allocation2 + $0xc0] sm:$0xff]
        %v727 = vld [vmem:[#allocation2 + $0xc8] sm:$0xff]
        %v728 = vld [vmem:[#allocation2 + $0xd0] sm:$0xff]
        %v729 = vld [vmem:[#allocation2 + $0xd8] sm:$0xff]
        %v730 = vld [vmem:[#allocation2 + $0xe0] sm:$0xff]
        %v731 = vld [vmem:[#allocation2 + $0xe8] sm:$0xff]
        %v732 = vld [vmem:[#allocation2 + $0xf0] sm:$0xff]
        %v733 = vld [vmem:[#allocation2 + $0xf8] sm:$0xff]
        %v734 = vld [vmem:[#allocation2 + $0x100] sm:$0xff]
        %v735 = vld [vmem:[#allocation2 + $0x108] sm:$0xff]
        %v736 = vld [vmem:[%s2 + $0x3] sm:$0x1]
        %v737 = vlaneseq
        %v738 = vshrl.u32 %v737, 7
        %v739 = vsub.s32 0, %v738
        %v740 = vrot.slane %v736, %v739
        %741 = vmatprep.subr.mxu0 0.0
        %742 = vmatpush1.msra.mxu0 %v719
        %743 = vmatprep.subr.mxu0 0.0
        %744 = vmatpush1.msra.mxu0 %v718
        %745 = vmatprep.subr.mxu0 0.0
        %746 = vmatpush1.msra.mxu0 %v717
        %747 = vmatprep.subr.mxu0 0.0
        %748 = vmatpush1.msra.mxu0 %v716
        %749 = vmatprep.subr.mxu0 0.0
        %750 = vmatpush1.msra.mxu0 %v715
        %751 = vmatprep.subr.mxu0 0.0
        %752 = vmatpush1.msra.mxu0 %v714
        %753 = vmatprep.subr.mxu0 0.0
        %754 = vmatpush1.msra.mxu0 %v713
        %755 = vmatprep.subr.mxu0 0.0
        %756 = vmatpush1.msra.mxu0 %v712
        %757 = vmatprep.subr.mxu0 0.0
        %758 = vmatpush1.msra.mxu0 %v711
        %759 = vmatprep.subr.mxu0 0.0
        %760 = vmatpush1.msra.mxu0 %v710
        %761 = vmatprep.subr.mxu0 0.0
        %762 = vmatpush1.msra.mxu0 %v709
        %763 = vmatprep.subr.mxu0 0.0
        %764 = vmatpush1.msra.mxu0 %v708
        %765 = vmatprep.subr.mxu0 0.0
        %766 = vmatpush1.msra.mxu0 %v707
        %767 = vmatprep.subr.mxu0 0.0
        %768 = vmatpush1.msra.mxu0 %v706
        %769 = vmatprep.subr.mxu0 0.0
        %770 = vmatpush1.msra.mxu0 %v705
        %771 = vmatprep.subr.mxu0 0.0
        %772 = vmatpush1.msra.mxu0 %v704
        %773 = vmatprep.subr.mxu0 0.0
        %774 = vmatpush2.msra.mxu0 %v735
        %775 = vmatprep.subr.mxu0 0.0
        %776 = vmatpush2.msra.mxu0 %v734
        %777 = vmatprep.subr.mxu0 0.0
        %778 = vmatpush2.msra.mxu0 %v733
        %779 = vmatprep.subr.mxu0 0.0
        %780 = vmatpush2.msra.mxu0 %v732
        %781 = vmatprep.subr.mxu0 0.0
        %782 = vmatpush2.msra.mxu0 %v731
        %783 = vmatprep.subr.mxu0 0.0
        %784 = vmatpush2.msra.mxu0 %v730
        %785 = vmatprep.subr.mxu0 0.0
        %786 = vmatpush2.msra.mxu0 %v729
        %787 = vmatprep.subr.mxu0 0.0
        %788 = vmatpush2.msra.mxu0 %v728
        %789 = vmatprep.subr.mxu0 0.0
        %790 = vmatpush2.msra.mxu0 %v727
        %791 = vmatprep.subr.mxu0 0.0
        %792 = vmatpush2.msra.mxu0 %v726
        %793 = vmatprep.subr.mxu0 0.0
        %794 = vmatpush2.msra.mxu0 %v725
        %795 = vmatprep.subr.mxu0 0.0
        %796 = vmatpush2.msra.mxu0 %v724
        %797 = vmatprep.subr.mxu0 0.0
        %798 = vmatpush2.msra.mxu0 %v723
        %799 = vmatprep.subr.mxu0 0.0
        %800 = vmatpush2.msra.mxu0 %v722
        %801 = vmatprep.subr.mxu0 0.0
        %802 = vmatpush2.msra.mxu0 %v721
        %803 = vmatprep.subr.mxu0 0.0
        %804 = vmatpush2.msra.mxu0 %v720
        %805 = vmatprep.mubr.f32.mxu0 %v688
        %806 = vmatmul.mubr.f32.gmra.mxu0 %v656
        %v807 = vpop.f32.mrf.mxu0
        %v808 = vadd.f32 %v740, %v807
        %v809 = vpop.f32.mrf.mxu0
        %810 = vmatprep.mubr.f32.mxu0 %v689
        %811 = vmatmul.mubr.f32.gmra.mxu0 %v657
        %v812 = vpop.f32.mrf.mxu0
        %v813 = vadd.f32 %v740, %v812
        %v814 = vpop.f32.mrf.mxu0
        %815 = vmatprep.mubr.f32.mxu0 %v690
        %816 = vmatmul.mubr.f32.gmra.mxu0 %v658
        %v817 = vpop.f32.mrf.mxu0
        %v818 = vadd.f32 %v740, %v817
        %v819 = vpop.f32.mrf.mxu0
        %820 = vmatprep.mubr.f32.mxu0 %v691
        %821 = vmatmul.mubr.f32.gmra.mxu0 %v659
        %v822 = vpop.f32.mrf.mxu0
        %v823 = vadd.f32 %v740, %v822
        %v824 = vpop.f32.mrf.mxu0
        %825 = vmatprep.mubr.f32.mxu0 %v692
        %826 = vmatmul.mubr.f32.gmra.mxu0 %v660
        %v827 = vpop.f32.mrf.mxu0
        %v828 = vadd.f32 %v740, %v827
        %v829 = vpop.f32.mrf.mxu0
        %830 = vmatprep.mubr.f32.mxu0 %v693
        %831 = vmatmul.mubr.f32.gmra.mxu0 %v661
        %v832 = vpop.f32.mrf.mxu0
        %v833 = vadd.f32 %v740, %v832
        %v834 = vpop.f32.mrf.mxu0
        %835 = vmatprep.mubr.f32.mxu0 %v694
        %836 = vmatmul.mubr.f32.gmra.mxu0 %v662
        %v837 = vpop.f32.mrf.mxu0
        %v838 = vadd.f32 %v740, %v837
        %v839 = vpop.f32.mrf.mxu0
        %840 = vmatprep.mubr.f32.mxu0 %v695
        %841 = vmatmul.mubr.f32.gmra.mxu0 %v663
        %v842 = vpop.f32.mrf.mxu0
        %v843 = vadd.f32 %v740, %v842
        %v844 = vpop.f32.mrf.mxu0
        %845 = vmatprep.mubr.f32.mxu0 %v696
        %846 = vmatmul.mubr.f32.gmra.mxu0 %v664
        %v847 = vpop.f32.mrf.mxu0
        %v848 = vadd.f32 %v740, %v847
        %v849 = vpop.f32.mrf.mxu0
        %850 = vmatprep.mubr.f32.mxu0 %v697
        %851 = vmatmul.mubr.f32.gmra.mxu0 %v665
        %v852 = vpop.f32.mrf.mxu0
        %v853 = vadd.f32 %v740, %v852
        %v854 = vpop.f32.mrf.mxu0
        %855 = vmatprep.mubr.f32.mxu0 %v698
        %856 = vmatmul.mubr.f32.gmra.mxu0 %v666
        %v857 = vpop.f32.mrf.mxu0
        %v858 = vadd.f32 %v740, %v857
        %v859 = vpop.f32.mrf.mxu0
        %860 = vmatprep.mubr.f32.mxu0 %v699
        %861 = vmatmul.mubr.f32.gmra.mxu0 %v667
        %v862 = vpop.f32.mrf.mxu0
        %v863 = vadd.f32 %v740, %v862
        %v864 = vpop.f32.mrf.mxu0
        %865 = vmatprep.mubr.f32.mxu0 %v700
        %866 = vmatmul.mubr.f32.gmra.mxu0 %v668
        %v867 = vpop.f32.mrf.mxu0
        %v868 = vadd.f32 %v740, %v867
        %v869 = vpop.f32.mrf.mxu0
        %870 = vmatprep.mubr.f32.mxu0 %v701
        %871 = vmatmul.mubr.f32.gmra.mxu0 %v669
        %v872 = vpop.f32.mrf.mxu0
        %v873 = vadd.f32 %v740, %v872
        %v874 = vpop.f32.mrf.mxu0
        %875 = vmatprep.mubr.f32.mxu0 %v702
        %876 = vmatmul.mubr.f32.gmra.mxu0 %v670
        %v877 = vpop.f32.mrf.mxu0
        %v878 = vadd.f32 %v740, %v877
        %v879 = vpop.f32.mrf.mxu0
        %880 = vmatprep.mubr.f32.mxu0 %v703
        %881 = vmatmul.mubr.f32.gmra.mxu0 %v671
        %v882 = vpop.f32.mrf.mxu0
        %v883 = vadd.f32 %v740, %v882
        %v884 = vpop.f32.mrf.mxu0
        %885 = vdwg.mxu0
        %v886 = vld [vmem:[%s2 + $0x4] sm:$0x1]
        %v887 = vld [vmem:[%s2 + $0x5] sm:$0x1]
        %888 = vadd.xlane.f32.xlu0 %v808
        %v889 = vpop.xlane.xlu0 %888
        %890 = vadd.xlane.f32.xlu0 %v813
        %v891 = vpop.xlane.xlu0 %890
        %892 = vadd.xlane.f32.xlu0 %v818
        %v893 = vpop.xlane.xlu0 %892
        %894 = vadd.xlane.f32.xlu0 %v823
        %v895 = vpop.xlane.xlu0 %894
        %896 = vadd.xlane.f32.xlu0 %v828
        %v897 = vpop.xlane.xlu0 %896
        %898 = vadd.xlane.f32.xlu0 %v833
        %v899 = vpop.xlane.xlu0 %898
        %900 = vadd.xlane.f32.xlu0 %v838
        %v901 = vpop.xlane.xlu0 %900
        %902 = vadd.xlane.f32.xlu0 %v843
        %v903 = vpop.xlane.xlu0 %902
        %904 = vadd.xlane.f32.xlu0 %v848
        %v905 = vpop.xlane.xlu0 %904
        %906 = vadd.xlane.f32.xlu0 %v853
        %v907 = vpop.xlane.xlu0 %906
        %908 = vadd.xlane.f32.xlu0 %v858
        %v909 = vpop.xlane.xlu0 %908
        %910 = vadd.xlane.f32.xlu0 %v863
        %v911 = vpop.xlane.xlu0 %910
        %912 = vadd.xlane.f32.xlu0 %v868
        %v913 = vpop.xlane.xlu0 %912
        %914 = vadd.xlane.f32.xlu0 %v873
        %v915 = vpop.xlane.xlu0 %914
        %916 = vadd.xlane.f32.xlu0 %v878
        %v917 = vpop.xlane.xlu0 %916
        %918 = vadd.xlane.f32.xlu0 %v883
        %v919 = vpop.xlane.xlu0 %918
        %v920 = vmul.f32 %v808, %v808
        %v921 = vmul.f32 %v813, %v813
        %v922 = vmul.f32 %v818, %v818
        %v923 = vmul.f32 %v823, %v823
        %v924 = vmul.f32 %v828, %v828
        %v925 = vmul.f32 %v833, %v833
        %v926 = vmul.f32 %v838, %v838
        %v927 = vmul.f32 %v843, %v843
        %v928 = vmul.f32 %v848, %v848
        %v929 = vmul.f32 %v853, %v853
        %v930 = vmul.f32 %v858, %v858
        %v931 = vmul.f32 %v863, %v863
        %v932 = vmul.f32 %v868, %v868
        %v933 = vmul.f32 %v873, %v873
        %v934 = vmul.f32 %v878, %v878
        %v935 = vmul.f32 %v883, %v883
        %936 = vadd.xlane.f32.xlu0 %v920
        %v937 = vpop.xlane.xlu0 %936
        %938 = vadd.xlane.f32.xlu0 %v921
        %v939 = vpop.xlane.xlu0 %938
        %940 = vadd.xlane.f32.xlu0 %v922
        %v941 = vpop.xlane.xlu0 %940
        %942 = vadd.xlane.f32.xlu0 %v923
        %v943 = vpop.xlane.xlu0 %942
        %944 = vadd.xlane.f32.xlu0 %v924
        %v945 = vpop.xlane.xlu0 %944
        %946 = vadd.xlane.f32.xlu0 %v925
        %v947 = vpop.xlane.xlu0 %946
        %948 = vadd.xlane.f32.xlu0 %v926
        %v949 = vpop.xlane.xlu0 %948
        %950 = vadd.xlane.f32.xlu0 %v927
        %v951 = vpop.xlane.xlu0 %950
        %952 = vadd.xlane.f32.xlu0 %v928
        %v953 = vpop.xlane.xlu0 %952
        %954 = vadd.xlane.f32.xlu0 %v929
        %v955 = vpop.xlane.xlu0 %954
        %956 = vadd.xlane.f32.xlu0 %v930
        %v957 = vpop.xlane.xlu0 %956
        %958 = vadd.xlane.f32.xlu0 %v931
        %v959 = vpop.xlane.xlu0 %958
        %960 = vadd.xlane.f32.xlu0 %v932
        %v961 = vpop.xlane.xlu0 %960
        %962 = vadd.xlane.f32.xlu0 %v933
        %v963 = vpop.xlane.xlu0 %962
        %964 = vadd.xlane.f32.xlu0 %v934
        %v965 = vpop.xlane.xlu0 %964
        %966 = vadd.xlane.f32.xlu0 %v935
        %v967 = vpop.xlane.xlu0 %966
        %v968 = vmul.f32 %v889, 0.03125
        %v969 = vmul.f32 %v891, 0.03125
        %v970 = vmul.f32 %v893, 0.03125
        %v971 = vmul.f32 %v895, 0.03125
        %v972 = vmul.f32 %v897, 0.03125
        %v973 = vmul.f32 %v899, 0.03125
        %v974 = vmul.f32 %v901, 0.03125
        %v975 = vmul.f32 %v903, 0.03125
        %v976 = vmul.f32 %v905, 0.03125
        %v977 = vmul.f32 %v907, 0.03125
        %v978 = vmul.f32 %v909, 0.03125
        %v979 = vmul.f32 %v911, 0.03125
        %v980 = vmul.f32 %v913, 0.03125
        %v981 = vmul.f32 %v915, 0.03125
        %v982 = vmul.f32 %v917, 0.03125
        %v983 = vmul.f32 %v919, 0.03125
        %v984 = vmul.f32 %v937, 0.03125
        %v985 = vmul.f32 %v939, 0.03125
        %v986 = vmul.f32 %v941, 0.03125
        %v987 = vmul.f32 %v943, 0.03125
        %v988 = vmul.f32 %v945, 0.03125
        %v989 = vmul.f32 %v947, 0.03125
        %v990 = vmul.f32 %v949, 0.03125
        %v991 = vmul.f32 %v951, 0.03125
        %v992 = vmul.f32 %v953, 0.03125
        %v993 = vmul.f32 %v955, 0.03125
        %v994 = vmul.f32 %v957, 0.03125
        %v995 = vmul.f32 %v959, 0.03125
        %v996 = vmul.f32 %v961, 0.03125
        %v997 = vmul.f32 %v963, 0.03125
        %v998 = vmul.f32 %v965, 0.03125
        %v999 = vmul.f32 %v967, 0.03125
        %v1000 = vmul.f32 %v968, %v968
        %v1001 = vmul.f32 %v969, %v969
        %v1002 = vmul.f32 %v970, %v970
        %v1003 = vmul.f32 %v971, %v971
        %v1004 = vmul.f32 %v972, %v972
        %v1005 = vmul.f32 %v973, %v973
        %v1006 = vmul.f32 %v974, %v974
        %v1007 = vmul.f32 %v975, %v975
        %v1008 = vmul.f32 %v976, %v976
        %v1009 = vmul.f32 %v977, %v977
        %v1010 = vmul.f32 %v978, %v978
        %v1011 = vmul.f32 %v979, %v979
        %v1012 = vmul.f32 %v980, %v980
        %v1013 = vmul.f32 %v981, %v981
        %v1014 = vmul.f32 %v982, %v982
        %v1015 = vmul.f32 %v983, %v983
        %v1016 = vsub.f32 %v984, %v1000
        %v1017 = vsub.f32 %v985, %v1001
        %v1018 = vsub.f32 %v986, %v1002
        %v1019 = vsub.f32 %v987, %v1003
        %v1020 = vsub.f32 %v988, %v1004
        %v1021 = vsub.f32 %v989, %v1005
        %v1022 = vsub.f32 %v990, %v1006
        %v1023 = vsub.f32 %v991, %v1007
        %v1024 = vsub.f32 %v992, %v1008
        %v1025 = vsub.f32 %v993, %v1009
        %v1026 = vsub.f32 %v994, %v1010
        %v1027 = vsub.f32 %v995, %v1011
        %v1028 = vsub.f32 %v996, %v1012
        %v1029 = vsub.f32 %v997, %v1013
        %v1030 = vsub.f32 %v998, %v1014
        %v1031 = vsub.f32 %v999, %v1015
        %v1032 = vsub.f32 %v808, %v968
        %v1033 = vsub.f32 %v813, %v969
        %v1034 = vsub.f32 %v818, %v970
        %v1035 = vsub.f32 %v823, %v971
        %v1036 = vsub.f32 %v828, %v972
        %v1037 = vsub.f32 %v833, %v973
        %v1038 = vsub.f32 %v838, %v974
        %v1039 = vsub.f32 %v843, %v975
        %v1040 = vsub.f32 %v848, %v976
        %v1041 = vsub.f32 %v853, %v977
        %v1042 = vsub.f32 %v858, %v978
        %v1043 = vsub.f32 %v863, %v979
        %v1044 = vsub.f32 %v868, %v980
        %v1045 = vsub.f32 %v873, %v981
        %v1046 = vsub.f32 %v878, %v982
        %v1047 = vsub.f32 %v883, %v983
        %v1048 = vadd.f32 %v1016, 1e-05
        %v1049 = vadd.f32 %v1017, 1e-05
        %v1050 = vadd.f32 %v1018, 1e-05
        %v1051 = vadd.f32 %v1019, 1e-05
        %v1052 = vadd.f32 %v1020, 1e-05
        %v1053 = vadd.f32 %v1021, 1e-05
        %v1054 = vadd.f32 %v1022, 1e-05
        %v1055 = vadd.f32 %v1023, 1e-05
        %v1056 = vadd.f32 %v1024, 1e-05
        %v1057 = vadd.f32 %v1025, 1e-05
        %v1058 = vadd.f32 %v1026, 1e-05
        %v1059 = vadd.f32 %v1027, 1e-05
        %v1060 = vadd.f32 %v1028, 1e-05
        %v1061 = vadd.f32 %v1029, 1e-05
        %v1062 = vadd.f32 %v1030, 1e-05
        %v1063 = vadd.f32 %v1031, 1e-05
        %v1064 = vrsqrt.pop %v1048
        %v1065 = vrsqrt.pop %v1049
        %v1066 = vrsqrt.pop %v1050
        %v1067 = vrsqrt.pop %v1051
        %v1068 = vrsqrt.pop %v1052
        %v1069 = vrsqrt.pop %v1053
        %v1070 = vrsqrt.pop %v1054
        %v1071 = vrsqrt.pop %v1055
        %v1072 = vrsqrt.pop %v1056
        %v1073 = vrsqrt.pop %v1057
        %v1074 = vrsqrt.pop %v1058
        %v1075 = vrsqrt.pop %v1059
        %v1076 = vrsqrt.pop %v1060
        %v1077 = vrsqrt.pop %v1061
        %v1078 = vrsqrt.pop %v1062
        %v1079 = vrsqrt.pop %v1063
        %v1080 = vmul.f32 %v1032, %v1064
        %v1081 = vmul.f32 %v1033, %v1065
        %v1082 = vmul.f32 %v1034, %v1066
        %v1083 = vmul.f32 %v1035, %v1067
        %v1084 = vmul.f32 %v1036, %v1068
        %v1085 = vmul.f32 %v1037, %v1069
        %v1086 = vmul.f32 %v1038, %v1070
        %v1087 = vmul.f32 %v1039, %v1071
        %v1088 = vmul.f32 %v1040, %v1072
        %v1089 = vmul.f32 %v1041, %v1073
        %v1090 = vmul.f32 %v1042, %v1074
        %v1091 = vmul.f32 %v1043, %v1075
        %v1092 = vmul.f32 %v1044, %v1076
        %v1093 = vmul.f32 %v1045, %v1077
        %v1094 = vmul.f32 %v1046, %v1078
        %v1095 = vmul.f32 %v1047, %v1079
        %v1096 = vlaneseq
        %v1097 = vshrl.u32 %v1096, 7
        %v1098 = vsub.s32 0, %v1097
        %v1099 = vrot.slane %v886, %v1098
        %v1100 = vmul.f32 %v1080, %v1099
        %v1101 = vmul.f32 %v1081, %v1099
        %v1102 = vmul.f32 %v1082, %v1099
        %v1103 = vmul.f32 %v1083, %v1099
        %v1104 = vmul.f32 %v1084, %v1099
        %v1105 = vmul.f32 %v1085, %v1099
        %v1106 = vmul.f32 %v1086, %v1099
        %v1107 = vmul.f32 %v1087, %v1099
        %v1108 = vmul.f32 %v1088, %v1099
        %v1109 = vmul.f32 %v1089, %v1099
        %v1110 = vmul.f32 %v1090, %v1099
        %v1111 = vmul.f32 %v1091, %v1099
        %v1112 = vmul.f32 %v1092, %v1099
        %v1113 = vmul.f32 %v1093, %v1099
        %v1114 = vmul.f32 %v1094, %v1099
        %v1115 = vmul.f32 %v1095, %v1099
        %v1116 = vlaneseq
        %v1117 = vshrl.u32 %v1116, 7
        %v1118 = vsub.s32 0, %v1117
        %v1119 = vrot.slane %v887, %v1118
        %v1120 = vadd.f32 %v1100, %v1119
        %v1121 = vadd.f32 %v1101, %v1119
        %v1122 = vadd.f32 %v1102, %v1119
        %v1123 = vadd.f32 %v1103, %v1119
        %v1124 = vadd.f32 %v1104, %v1119
        %v1125 = vadd.f32 %v1105, %v1119
        %v1126 = vadd.f32 %v1106, %v1119
        %v1127 = vadd.f32 %v1107, %v1119
        %v1128 = vadd.f32 %v1108, %v1119
        %v1129 = vadd.f32 %v1109, %v1119
        %v1130 = vadd.f32 %v1110, %v1119
        %v1131 = vadd.f32 %v1111, %v1119
        %v1132 = vadd.f32 %v1112, %v1119
        %v1133 = vadd.f32 %v1113, %v1119
        %v1134 = vadd.f32 %v1114, %v1119
        %v1135 = vadd.f32 %v1115, %v1119
        %v1136 = vmax.f32 %v1120, 0.0
        %v1137 = vmax.f32 %v1121, 0.0
        %v1138 = vmax.f32 %v1122, 0.0
        %v1139 = vmax.f32 %v1123, 0.0
        %v1140 = vmax.f32 %v1124, 0.0
        %v1141 = vmax.f32 %v1125, 0.0
        %v1142 = vmax.f32 %v1126, 0.0
        %v1143 = vmax.f32 %v1127, 0.0
        %v1144 = vmax.f32 %v1128, 0.0
        %v1145 = vmax.f32 %v1129, 0.0
        %v1146 = vmax.f32 %v1130, 0.0
        %v1147 = vmax.f32 %v1131, 0.0
        %v1148 = vmax.f32 %v1132, 0.0
        %v1149 = vmax.f32 %v1133, 0.0
        %v1150 = vmax.f32 %v1134, 0.0
        %v1151 = vmax.f32 %v1135, 0.0
        %v1152 = vsub.f32 0.0, %v1120
        %v1153 = vsub.f32 0.0, %v1121
        %v1154 = vsub.f32 0.0, %v1122
        %v1155 = vsub.f32 0.0, %v1123
        %v1156 = vsub.f32 0.0, %v1124
        %v1157 = vsub.f32 0.0, %v1125
        %v1158 = vsub.f32 0.0, %v1126
        %v1159 = vsub.f32 0.0, %v1127
        %v1160 = vsub.f32 0.0, %v1128
        %v1161 = vsub.f32 0.0, %v1129
        %v1162 = vsub.f32 0.0, %v1130
        %v1163 = vsub.f32 0.0, %v1131
        %v1164 = vsub.f32 0.0, %v1132
        %v1165 = vsub.f32 0.0, %v1133
        %v1166 = vsub.f32 0.0, %v1134
        %v1167 = vsub.f32 0.0, %v1135
        %v1168 = vmax.f32 %v1152, 0.0
        %v1169 = vmax.f32 %v1153, 0.0
        %v1170 = vmax.f32 %v1154, 0.0
        %v1171 = vmax.f32 %v1155, 0.0
        %v1172 = vmax.f32 %v1156, 0.0
        %v1173 = vmax.f32 %v1157, 0.0
        %v1174 = vmax.f32 %v1158, 0.0
        %v1175 = vmax.f32 %v1159, 0.0
        %v1176 = vmax.f32 %v1160, 0.0
        %v1177 = vmax.f32 %v1161, 0.0
        %v1178 = vmax.f32 %v1162, 0.0
        %v1179 = vmax.f32 %v1163, 0.0
        %v1180 = vmax.f32 %v1164, 0.0
        %v1181 = vmax.f32 %v1165, 0.0
        %v1182 = vmax.f32 %v1166, 0.0
        %v1183 = vmax.f32 %v1167, 0.0
        %v1184 = vld [vmem:[#allocation2 + $0x110] sm:$0xff]
        %v1185 = vld [vmem:[#allocation2 + $0x118] sm:$0xff]
        %v1186 = vld [vmem:[#allocation2 + $0x120] sm:$0xff]
        %v1187 = vld [vmem:[#allocation2 + $0x128] sm:$0xff]
        %v1188 = vld [vmem:[#allocation2 + $0x130] sm:$0xff]
        %v1189 = vld [vmem:[#allocation2 + $0x138] sm:$0xff]
        %v1190 = vld [vmem:[#allocation2 + $0x140] sm:$0xff]
        %v1191 = vld [vmem:[#allocation2 + $0x148] sm:$0xff]
        %v1192 = vld [vmem:[#allocation2 + $0x150] sm:$0xff]
        %v1193 = vld [vmem:[#allocation2 + $0x158] sm:$0xff]
        %v1194 = vld [vmem:[#allocation2 + $0x160] sm:$0xff]
        %v1195 = vld [vmem:[#allocation2 + $0x168] sm:$0xff]
        %v1196 = vld [vmem:[#allocation2 + $0x170] sm:$0xff]
        %v1197 = vld [vmem:[#allocation2 + $0x178] sm:$0xff]
        %v1198 = vld [vmem:[#allocation2 + $0x180] sm:$0xff]
        %v1199 = vld [vmem:[#allocation2 + $0x188] sm:$0xff]
        %v1200 = vld [vmem:[#allocation2 + $0x190] sm:$0xff]
        %v1201 = vld [vmem:[#allocation2 + $0x198] sm:$0xff]
        %v1202 = vld [vmem:[#allocation2 + $0x1a0] sm:$0xff]
        %v1203 = vld [vmem:[#allocation2 + $0x1a8] sm:$0xff]
        %v1204 = vld [vmem:[#allocation2 + $0x1b0] sm:$0xff]
        %v1205 = vld [vmem:[#allocation2 + $0x1b8] sm:$0xff]
        %v1206 = vld [vmem:[#allocation2 + $0x1c0] sm:$0xff]
        %v1207 = vld [vmem:[#allocation2 + $0x1c8] sm:$0xff]
        %v1208 = vld [vmem:[#allocation2 + $0x1d0] sm:$0xff]
        %v1209 = vld [vmem:[#allocation2 + $0x1d8] sm:$0xff]
        %v1210 = vld [vmem:[#allocation2 + $0x1e0] sm:$0xff]
        %v1211 = vld [vmem:[#allocation2 + $0x1e8] sm:$0xff]
        %v1212 = vld [vmem:[#allocation2 + $0x1f0] sm:$0xff]
        %v1213 = vld [vmem:[#allocation2 + $0x1f8] sm:$0xff]
        %v1214 = vld [vmem:[#allocation2 + $0x200] sm:$0xff]
        %v1215 = vld [vmem:[#allocation2 + $0x208] sm:$0xff]
        %v1216 = vld [vmem:[%s2 + $0x6] sm:$0x1]
        %v1217 = vlaneseq
        %v1218 = vshrl.u32 %v1217, 7
        %v1219 = vsub.s32 0, %v1218
        %v1220 = vrot.slane %v1216, %v1219
        %1221 = vmatprep.subr.mxu0 0.0
        %1222 = vmatpush1.msra.mxu0 %v1199
        %1223 = vmatprep.subr.mxu0 0.0
        %1224 = vmatpush1.msra.mxu0 %v1198
        %1225 = vmatprep.subr.mxu0 0.0
        %1226 = vmatpush1.msra.mxu0 %v1197
        %1227 = vmatprep.subr.mxu0 0.0
        %1228 = vmatpush1.msra.mxu0 %v1196
        %1229 = vmatprep.subr.mxu0 0.0
        %1230 = vmatpush1.msra.mxu0 %v1195
        %1231 = vmatprep.subr.mxu0 0.0
        %1232 = vmatpush1.msra.mxu0 %v1194
        %1233 = vmatprep.subr.mxu0 0.0
        %1234 = vmatpush1.msra.mxu0 %v1193
        %1235 = vmatprep.subr.mxu0 0.0
        %1236 = vmatpush1.msra.mxu0 %v1192
        %1237 = vmatprep.subr.mxu0 0.0
        %1238 = vmatpush1.msra.mxu0 %v1191
        %1239 = vmatprep.subr.mxu0 0.0
        %1240 = vmatpush1.msra.mxu0 %v1190
        %1241 = vmatprep.subr.mxu0 0.0
        %1242 = vmatpush1.msra.mxu0 %v1189
        %1243 = vmatprep.subr.mxu0 0.0
        %1244 = vmatpush1.msra.mxu0 %v1188
        %1245 = vmatprep.subr.mxu0 0.0
        %1246 = vmatpush1.msra.mxu0 %v1187
        %1247 = vmatprep.subr.mxu0 0.0
        %1248 = vmatpush1.msra.mxu0 %v1186
        %1249 = vmatprep.subr.mxu0 0.0
        %1250 = vmatpush1.msra.mxu0 %v1185
        %1251 = vmatprep.subr.mxu0 0.0
        %1252 = vmatpush1.msra.mxu0 %v1184
        %1253 = vmatprep.subr.mxu0 0.0
        %1254 = vmatpush2.msra.mxu0 %v1215
        %1255 = vmatprep.subr.mxu0 0.0
        %1256 = vmatpush2.msra.mxu0 %v1214
        %1257 = vmatprep.subr.mxu0 0.0
        %1258 = vmatpush2.msra.mxu0 %v1213
        %1259 = vmatprep.subr.mxu0 0.0
        %1260 = vmatpush2.msra.mxu0 %v1212
        %1261 = vmatprep.subr.mxu0 0.0
        %1262 = vmatpush2.msra.mxu0 %v1211
        %1263 = vmatprep.subr.mxu0 0.0
        %1264 = vmatpush2.msra.mxu0 %v1210
        %1265 = vmatprep.subr.mxu0 0.0
        %1266 = vmatpush2.msra.mxu0 %v1209
        %1267 = vmatprep.subr.mxu0 0.0
        %1268 = vmatpush2.msra.mxu0 %v1208
        %1269 = vmatprep.subr.mxu0 0.0
        %1270 = vmatpush2.msra.mxu0 %v1207
        %1271 = vmatprep.subr.mxu0 0.0
        %1272 = vmatpush2.msra.mxu0 %v1206
        %1273 = vmatprep.subr.mxu0 0.0
        %1274 = vmatpush2.msra.mxu0 %v1205
        %1275 = vmatprep.subr.mxu0 0.0
        %1276 = vmatpush2.msra.mxu0 %v1204
        %1277 = vmatprep.subr.mxu0 0.0
        %1278 = vmatpush2.msra.mxu0 %v1203
        %1279 = vmatprep.subr.mxu0 0.0
        %1280 = vmatpush2.msra.mxu0 %v1202
        %1281 = vmatprep.subr.mxu0 0.0
        %1282 = vmatpush2.msra.mxu0 %v1201
        %1283 = vmatprep.subr.mxu0 0.0
        %1284 = vmatpush2.msra.mxu0 %v1200
        %1285 = vmatprep.mubr.f32.mxu0 %v1168
        %1286 = vmatmul.mubr.f32.gmra.mxu0 %v1136
        %v1287 = vpop.f32.mrf.mxu0
        %v1288 = vadd.f32 %v1220, %v1287
        %v1289 = vpop.f32.mrf.mxu0
        %1290 = vmatprep.mubr.f32.mxu0 %v1169
        %1291 = vmatmul.mubr.f32.gmra.mxu0 %v1137
        %v1292 = vpop.f32.mrf.mxu0
        %v1293 = vadd.f32 %v1220, %v1292
        %v1294 = vpop.f32.mrf.mxu0
        %1295 = vmatprep.mubr.f32.mxu0 %v1170
        %1296 = vmatmul.mubr.f32.gmra.mxu0 %v1138
        %v1297 = vpop.f32.mrf.mxu0
        %v1298 = vadd.f32 %v1220, %v1297
        %v1299 = vpop.f32.mrf.mxu0
        %1300 = vmatprep.mubr.f32.mxu0 %v1171
        %1301 = vmatmul.mubr.f32.gmra.mxu0 %v1139
        %v1302 = vpop.f32.mrf.mxu0
        %v1303 = vadd.f32 %v1220, %v1302
        %v1304 = vpop.f32.mrf.mxu0
        %1305 = vmatprep.mubr.f32.mxu0 %v1172
        %1306 = vmatmul.mubr.f32.gmra.mxu0 %v1140
        %v1307 = vpop.f32.mrf.mxu0
        %v1308 = vadd.f32 %v1220, %v1307
        %v1309 = vpop.f32.mrf.mxu0
        %1310 = vmatprep.mubr.f32.mxu0 %v1173
        %1311 = vmatmul.mubr.f32.gmra.mxu0 %v1141
        %v1312 = vpop.f32.mrf.mxu0
        %v1313 = vadd.f32 %v1220, %v1312
        %v1314 = vpop.f32.mrf.mxu0
        %1315 = vmatprep.mubr.f32.mxu0 %v1174
        %1316 = vmatmul.mubr.f32.gmra.mxu0 %v1142
        %v1317 = vpop.f32.mrf.mxu0
        %v1318 = vadd.f32 %v1220, %v1317
        %v1319 = vpop.f32.mrf.mxu0
        %1320 = vmatprep.mubr.f32.mxu0 %v1175
        %1321 = vmatmul.mubr.f32.gmra.mxu0 %v1143
        %v1322 = vpop.f32.mrf.mxu0
        %v1323 = vadd.f32 %v1220, %v1322
        %v1324 = vpop.f32.mrf.mxu0
        %1325 = vmatprep.mubr.f32.mxu0 %v1176
        %1326 = vmatmul.mubr.f32.gmra.mxu0 %v1144
        %v1327 = vpop.f32.mrf.mxu0
        %v1328 = vadd.f32 %v1220, %v1327
        %v1329 = vpop.f32.mrf.mxu0
        %1330 = vmatprep.mubr.f32.mxu0 %v1177
        %1331 = vmatmul.mubr.f32.gmra.mxu0 %v1145
        %v1332 = vpop.f32.mrf.mxu0
        %v1333 = vadd.f32 %v1220, %v1332
        %v1334 = vpop.f32.mrf.mxu0
        %1335 = vmatprep.mubr.f32.mxu0 %v1178
        %1336 = vmatmul.mubr.f32.gmra.mxu0 %v1146
        %v1337 = vpop.f32.mrf.mxu0
        %v1338 = vadd.f32 %v1220, %v1337
        %v1339 = vpop.f32.mrf.mxu0
        %1340 = vmatprep.mubr.f32.mxu0 %v1179
        %1341 = vmatmul.mubr.f32.gmra.mxu0 %v1147
        %v1342 = vpop.f32.mrf.mxu0
        %v1343 = vadd.f32 %v1220, %v1342
        %v1344 = vpop.f32.mrf.mxu0
        %1345 = vmatprep.mubr.f32.mxu0 %v1180
        %1346 = vmatmul.mubr.f32.gmra.mxu0 %v1148
        %v1347 = vpop.f32.mrf.mxu0
        %v1348 = vadd.f32 %v1220, %v1347
        %v1349 = vpop.f32.mrf.mxu0
        %1350 = vmatprep.mubr.f32.mxu0 %v1181
        %1351 = vmatmul.mubr.f32.gmra.mxu0 %v1149
        %v1352 = vpop.f32.mrf.mxu0
        %v1353 = vadd.f32 %v1220, %v1352
        %v1354 = vpop.f32.mrf.mxu0
        %1355 = vmatprep.mubr.f32.mxu0 %v1182
        %1356 = vmatmul.mubr.f32.gmra.mxu0 %v1150
        %v1357 = vpop.f32.mrf.mxu0
        %v1358 = vadd.f32 %v1220, %v1357
        %v1359 = vpop.f32.mrf.mxu0
        %1360 = vmatprep.mubr.f32.mxu0 %v1183
        %1361 = vmatmul.mubr.f32.gmra.mxu0 %v1151
        %v1362 = vpop.f32.mrf.mxu0
        %v1363 = vadd.f32 %v1220, %v1362
        %v1364 = vpop.f32.mrf.mxu0
        %1365 = vdwg.mxu0
        %v1366 = vld [vmem:[%s2 + $0x7] sm:$0x1]
        %v1367 = vld [vmem:[%s2 + $0x8] sm:$0x1]
        %1368 = vadd.xlane.f32.xlu0 %v1288
        %v1369 = vpop.xlane.xlu0 %1368
        %1370 = vadd.xlane.f32.xlu0 %v1293
        %v1371 = vpop.xlane.xlu0 %1370
        %1372 = vadd.xlane.f32.xlu0 %v1298
        %v1373 = vpop.xlane.xlu0 %1372
        %1374 = vadd.xlane.f32.xlu0 %v1303
        %v1375 = vpop.xlane.xlu0 %1374
        %1376 = vadd.xlane.f32.xlu0 %v1308
        %v1377 = vpop.xlane.xlu0 %1376
        %1378 = vadd.xlane.f32.xlu0 %v1313
        %v1379 = vpop.xlane.xlu0 %1378
        %1380 = vadd.xlane.f32.xlu0 %v1318
        %v1381 = vpop.xlane.xlu0 %1380
        %1382 = vadd.xlane.f32.xlu0 %v1323
        %v1383 = vpop.xlane.xlu0 %1382
        %1384 = vadd.xlane.f32.xlu0 %v1328
        %v1385 = vpop.xlane.xlu0 %1384
        %1386 = vadd.xlane.f32.xlu0 %v1333
        %v1387 = vpop.xlane.xlu0 %1386
        %1388 = vadd.xlane.f32.xlu0 %v1338
        %v1389 = vpop.xlane.xlu0 %1388
        %1390 = vadd.xlane.f32.xlu0 %v1343
        %v1391 = vpop.xlane.xlu0 %1390
        %1392 = vadd.xlane.f32.xlu0 %v1348
        %v1393 = vpop.xlane.xlu0 %1392
        %1394 = vadd.xlane.f32.xlu0 %v1353
        %v1395 = vpop.xlane.xlu0 %1394
        %1396 = vadd.xlane.f32.xlu0 %v1358
        %v1397 = vpop.xlane.xlu0 %1396
        %1398 = vadd.xlane.f32.xlu0 %v1363
        %v1399 = vpop.xlane.xlu0 %1398
        %v1400 = vmul.f32 %v1288, %v1288
        %v1401 = vmul.f32 %v1293, %v1293
        %v1402 = vmul.f32 %v1298, %v1298
        %v1403 = vmul.f32 %v1303, %v1303
        %v1404 = vmul.f32 %v1308, %v1308
        %v1405 = vmul.f32 %v1313, %v1313
        %v1406 = vmul.f32 %v1318, %v1318
        %v1407 = vmul.f32 %v1323, %v1323
        %v1408 = vmul.f32 %v1328, %v1328
        %v1409 = vmul.f32 %v1333, %v1333
        %v1410 = vmul.f32 %v1338, %v1338
        %v1411 = vmul.f32 %v1343, %v1343
        %v1412 = vmul.f32 %v1348, %v1348
        %v1413 = vmul.f32 %v1353, %v1353
        %v1414 = vmul.f32 %v1358, %v1358
        %v1415 = vmul.f32 %v1363, %v1363
        %1416 = vadd.xlane.f32.xlu0 %v1400
        %v1417 = vpop.xlane.xlu0 %1416
        %1418 = vadd.xlane.f32.xlu0 %v1401
        %v1419 = vpop.xlane.xlu0 %1418
        %1420 = vadd.xlane.f32.xlu0 %v1402
        %v1421 = vpop.xlane.xlu0 %1420
        %1422 = vadd.xlane.f32.xlu0 %v1403
        %v1423 = vpop.xlane.xlu0 %1422
        %1424 = vadd.xlane.f32.xlu0 %v1404
        %v1425 = vpop.xlane.xlu0 %1424
        %1426 = vadd.xlane.f32.xlu0 %v1405
        %v1427 = vpop.xlane.xlu0 %1426
        %1428 = vadd.xlane.f32.xlu0 %v1406
        %v1429 = vpop.xlane.xlu0 %1428
        %1430 = vadd.xlane.f32.xlu0 %v1407
        %v1431 = vpop.xlane.xlu0 %1430
        %1432 = vadd.xlane.f32.xlu0 %v1408
        %v1433 = vpop.xlane.xlu0 %1432
        %1434 = vadd.xlane.f32.xlu0 %v1409
        %v1435 = vpop.xlane.xlu0 %1434
        %1436 = vadd.xlane.f32.xlu0 %v1410
        %v1437 = vpop.xlane.xlu0 %1436
        %1438 = vadd.xlane.f32.xlu0 %v1411
        %v1439 = vpop.xlane.xlu0 %1438
        %1440 = vadd.xlane.f32.xlu0 %v1412
        %v1441 = vpop.xlane.xlu0 %1440
        %1442 = vadd.xlane.f32.xlu0 %v1413
        %v1443 = vpop.xlane.xlu0 %1442
        %1444 = vadd.xlane.f32.xlu0 %v1414
        %v1445 = vpop.xlane.xlu0 %1444
        %1446 = vadd.xlane.f32.xlu0 %v1415
        %v1447 = vpop.xlane.xlu0 %1446
        %v1448 = vmul.f32 %v1369, 0.03125
        %v1449 = vmul.f32 %v1371, 0.03125
        %v1450 = vmul.f32 %v1373, 0.03125
        %v1451 = vmul.f32 %v1375, 0.03125
        %v1452 = vmul.f32 %v1377, 0.03125
        %v1453 = vmul.f32 %v1379, 0.03125
        %v1454 = vmul.f32 %v1381, 0.03125
        %v1455 = vmul.f32 %v1383, 0.03125
        %v1456 = vmul.f32 %v1385, 0.03125
        %v1457 = vmul.f32 %v1387, 0.03125
        %v1458 = vmul.f32 %v1389, 0.03125
        %v1459 = vmul.f32 %v1391, 0.03125
        %v1460 = vmul.f32 %v1393, 0.03125
        %v1461 = vmul.f32 %v1395, 0.03125
        %v1462 = vmul.f32 %v1397, 0.03125
        %v1463 = vmul.f32 %v1399, 0.03125
        %v1464 = vmul.f32 %v1417, 0.03125
        %v1465 = vmul.f32 %v1419, 0.03125
        %v1466 = vmul.f32 %v1421, 0.03125
        %v1467 = vmul.f32 %v1423, 0.03125
        %v1468 = vmul.f32 %v1425, 0.03125
        %v1469 = vmul.f32 %v1427, 0.03125
        %v1470 = vmul.f32 %v1429, 0.03125
        %v1471 = vmul.f32 %v1431, 0.03125
        %v1472 = vmul.f32 %v1433, 0.03125
        %v1473 = vmul.f32 %v1435, 0.03125
        %v1474 = vmul.f32 %v1437, 0.03125
        %v1475 = vmul.f32 %v1439, 0.03125
        %v1476 = vmul.f32 %v1441, 0.03125
        %v1477 = vmul.f32 %v1443, 0.03125
        %v1478 = vmul.f32 %v1445, 0.03125
        %v1479 = vmul.f32 %v1447, 0.03125
        %v1480 = vmul.f32 %v1448, %v1448
        %v1481 = vmul.f32 %v1449, %v1449
        %v1482 = vmul.f32 %v1450, %v1450
        %v1483 = vmul.f32 %v1451, %v1451
        %v1484 = vmul.f32 %v1452, %v1452
        %v1485 = vmul.f32 %v1453, %v1453
        %v1486 = vmul.f32 %v1454, %v1454
        %v1487 = vmul.f32 %v1455, %v1455
        %v1488 = vmul.f32 %v1456, %v1456
        %v1489 = vmul.f32 %v1457, %v1457
        %v1490 = vmul.f32 %v1458, %v1458
        %v1491 = vmul.f32 %v1459, %v1459
        %v1492 = vmul.f32 %v1460, %v1460
        %v1493 = vmul.f32 %v1461, %v1461
        %v1494 = vmul.f32 %v1462, %v1462
        %v1495 = vmul.f32 %v1463, %v1463
        %v1496 = vsub.f32 %v1464, %v1480
        %v1497 = vsub.f32 %v1465, %v1481
        %v1498 = vsub.f32 %v1466, %v1482
        %v1499 = vsub.f32 %v1467, %v1483
        %v1500 = vsub.f32 %v1468, %v1484
        %v1501 = vsub.f32 %v1469, %v1485
        %v1502 = vsub.f32 %v1470, %v1486
        %v1503 = vsub.f32 %v1471, %v1487
        %v1504 = vsub.f32 %v1472, %v1488
        %v1505 = vsub.f32 %v1473, %v1489
        %v1506 = vsub.f32 %v1474, %v1490
        %v1507 = vsub.f32 %v1475, %v1491
        %v1508 = vsub.f32 %v1476, %v1492
        %v1509 = vsub.f32 %v1477, %v1493
        %v1510 = vsub.f32 %v1478, %v1494
        %v1511 = vsub.f32 %v1479, %v1495
        %v1512 = vsub.f32 %v1288, %v1448
        %v1513 = vsub.f32 %v1293, %v1449
        %v1514 = vsub.f32 %v1298, %v1450
        %v1515 = vsub.f32 %v1303, %v1451
        %v1516 = vsub.f32 %v1308, %v1452
        %v1517 = vsub.f32 %v1313, %v1453
        %v1518 = vsub.f32 %v1318, %v1454
        %v1519 = vsub.f32 %v1323, %v1455
        %v1520 = vsub.f32 %v1328, %v1456
        %v1521 = vsub.f32 %v1333, %v1457
        %v1522 = vsub.f32 %v1338, %v1458
        %v1523 = vsub.f32 %v1343, %v1459
        %v1524 = vsub.f32 %v1348, %v1460
        %v1525 = vsub.f32 %v1353, %v1461
        %v1526 = vsub.f32 %v1358, %v1462
        %v1527 = vsub.f32 %v1363, %v1463
        %v1528 = vadd.f32 %v1496, 1e-05
        %v1529 = vadd.f32 %v1497, 1e-05
        %v1530 = vadd.f32 %v1498, 1e-05
        %v1531 = vadd.f32 %v1499, 1e-05
        %v1532 = vadd.f32 %v1500, 1e-05
        %v1533 = vadd.f32 %v1501, 1e-05
        %v1534 = vadd.f32 %v1502, 1e-05
        %v1535 = vadd.f32 %v1503, 1e-05
        %v1536 = vadd.f32 %v1504, 1e-05
        %v1537 = vadd.f32 %v1505, 1e-05
        %v1538 = vadd.f32 %v1506, 1e-05
        %v1539 = vadd.f32 %v1507, 1e-05
        %v1540 = vadd.f32 %v1508, 1e-05
        %v1541 = vadd.f32 %v1509, 1e-05
        %v1542 = vadd.f32 %v1510, 1e-05
        %v1543 = vadd.f32 %v1511, 1e-05
        %v1544 = vrsqrt.pop %v1528
        %v1545 = vrsqrt.pop %v1529
        %v1546 = vrsqrt.pop %v1530
        %v1547 = vrsqrt.pop %v1531
        %v1548 = vrsqrt.pop %v1532
        %v1549 = vrsqrt.pop %v1533
        %v1550 = vrsqrt.pop %v1534
        %v1551 = vrsqrt.pop %v1535
        %v1552 = vrsqrt.pop %v1536
        %v1553 = vrsqrt.pop %v1537
        %v1554 = vrsqrt.pop %v1538
        %v1555 = vrsqrt.pop %v1539
        %v1556 = vrsqrt.pop %v1540
        %v1557 = vrsqrt.pop %v1541
        %v1558 = vrsqrt.pop %v1542
        %v1559 = vrsqrt.pop %v1543
        %v1560 = vmul.f32 %v1512, %v1544
        %v1561 = vmul.f32 %v1513, %v1545
        %v1562 = vmul.f32 %v1514, %v1546
        %v1563 = vmul.f32 %v1515, %v1547
        %v1564 = vmul.f32 %v1516, %v1548
        %v1565 = vmul.f32 %v1517, %v1549
        %v1566 = vmul.f32 %v1518, %v1550
        %v1567 = vmul.f32 %v1519, %v1551
        %v1568 = vmul.f32 %v1520, %v1552
        %v1569 = vmul.f32 %v1521, %v1553
        %v1570 = vmul.f32 %v1522, %v1554
        %v1571 = vmul.f32 %v1523, %v1555
        %v1572 = vmul.f32 %v1524, %v1556
        %v1573 = vmul.f32 %v1525, %v1557
        %v1574 = vmul.f32 %v1526, %v1558
        %v1575 = vmul.f32 %v1527, %v1559
        %v1576 = vlaneseq
        %v1577 = vshrl.u32 %v1576, 7
        %v1578 = vsub.s32 0, %v1577
        %v1579 = vrot.slane %v1366, %v1578
        %v1580 = vmul.f32 %v1560, %v1579
        %v1581 = vmul.f32 %v1561, %v1579
        %v1582 = vmul.f32 %v1562, %v1579
        %v1583 = vmul.f32 %v1563, %v1579
        %v1584 = vmul.f32 %v1564, %v1579
        %v1585 = vmul.f32 %v1565, %v1579
        %v1586 = vmul.f32 %v1566, %v1579
        %v1587 = vmul.f32 %v1567, %v1579
        %v1588 = vmul.f32 %v1568, %v1579
        %v1589 = vmul.f32 %v1569, %v1579
        %v1590 = vmul.f32 %v1570, %v1579
        %v1591 = vmul.f32 %v1571, %v1579
        %v1592 = vmul.f32 %v1572, %v1579
        %v1593 = vmul.f32 %v1573, %v1579
        %v1594 = vmul.f32 %v1574, %v1579
        %v1595 = vmul.f32 %v1575, %v1579
        %v1596 = vlaneseq
        %v1597 = vshrl.u32 %v1596, 7
        %v1598 = vsub.s32 0, %v1597
        %v1599 = vrot.slane %v1367, %v1598
        %v1600 = vadd.f32 %v1580, %v1599
        %v1601 = vadd.f32 %v1581, %v1599
        %v1602 = vadd.f32 %v1582, %v1599
        %v1603 = vadd.f32 %v1583, %v1599
        %v1604 = vadd.f32 %v1584, %v1599
        %v1605 = vadd.f32 %v1585, %v1599
        %v1606 = vadd.f32 %v1586, %v1599
        %v1607 = vadd.f32 %v1587, %v1599
        %v1608 = vadd.f32 %v1588, %v1599
        %v1609 = vadd.f32 %v1589, %v1599
        %v1610 = vadd.f32 %v1590, %v1599
        %v1611 = vadd.f32 %v1591, %v1599
        %v1612 = vadd.f32 %v1592, %v1599
        %v1613 = vadd.f32 %v1593, %v1599
        %v1614 = vadd.f32 %v1594, %v1599
        %v1615 = vadd.f32 %v1595, %v1599
        %v1616 = vmax.f32 %v1600, 0.0
        %v1617 = vmax.f32 %v1601, 0.0
        %v1618 = vmax.f32 %v1602, 0.0
        %v1619 = vmax.f32 %v1603, 0.0
        %v1620 = vmax.f32 %v1604, 0.0
        %v1621 = vmax.f32 %v1605, 0.0
        %v1622 = vmax.f32 %v1606, 0.0
        %v1623 = vmax.f32 %v1607, 0.0
        %v1624 = vmax.f32 %v1608, 0.0
        %v1625 = vmax.f32 %v1609, 0.0
        %v1626 = vmax.f32 %v1610, 0.0
        %v1627 = vmax.f32 %v1611, 0.0
        %v1628 = vmax.f32 %v1612, 0.0
        %v1629 = vmax.f32 %v1613, 0.0
        %v1630 = vmax.f32 %v1614, 0.0
        %v1631 = vmax.f32 %v1615, 0.0
        %v1632 = vsub.f32 0.0, %v1600
        %v1633 = vsub.f32 0.0, %v1601
        %v1634 = vsub.f32 0.0, %v1602
        %v1635 = vsub.f32 0.0, %v1603
        %v1636 = vsub.f32 0.0, %v1604
        %v1637 = vsub.f32 0.0, %v1605
        %v1638 = vsub.f32 0.0, %v1606
        %v1639 = vsub.f32 0.0, %v1607
        %v1640 = vsub.f32 0.0, %v1608
        %v1641 = vsub.f32 0.0, %v1609
        %v1642 = vsub.f32 0.0, %v1610
        %v1643 = vsub.f32 0.0, %v1611
        %v1644 = vsub.f32 0.0, %v1612
        %v1645 = vsub.f32 0.0, %v1613
        %v1646 = vsub.f32 0.0, %v1614
        %v1647 = vsub.f32 0.0, %v1615
        %v1648 = vmax.f32 %v1632, 0.0
        %v1649 = vmax.f32 %v1633, 0.0
        %v1650 = vmax.f32 %v1634, 0.0
        %v1651 = vmax.f32 %v1635, 0.0
        %v1652 = vmax.f32 %v1636, 0.0
        %v1653 = vmax.f32 %v1637, 0.0
        %v1654 = vmax.f32 %v1638, 0.0
        %v1655 = vmax.f32 %v1639, 0.0
        %v1656 = vmax.f32 %v1640, 0.0
        %v1657 = vmax.f32 %v1641, 0.0
        %v1658 = vmax.f32 %v1642, 0.0
        %v1659 = vmax.f32 %v1643, 0.0
        %v1660 = vmax.f32 %v1644, 0.0
        %v1661 = vmax.f32 %v1645, 0.0
        %v1662 = vmax.f32 %v1646, 0.0
        %v1663 = vmax.f32 %v1647, 0.0
        %v1664 = vld [vmem:[#allocation2 + $0x210] sm:$0xff]
        %v1665 = vld [vmem:[#allocation2 + $0x218] sm:$0xff]
        %v1666 = vld [vmem:[#allocation2 + $0x220] sm:$0xff]
        %v1667 = vld [vmem:[#allocation2 + $0x228] sm:$0xff]
        %v1668 = vld [vmem:[#allocation2 + $0x230] sm:$0xff]
        %v1669 = vld [vmem:[#allocation2 + $0x238] sm:$0xff]
        %v1670 = vld [vmem:[#allocation2 + $0x240] sm:$0xff]
        %v1671 = vld [vmem:[#allocation2 + $0x248] sm:$0xff]
        %v1672 = vld [vmem:[#allocation2 + $0x250] sm:$0xff]
        %v1673 = vld [vmem:[#allocation2 + $0x258] sm:$0xff]
        %v1674 = vld [vmem:[#allocation2 + $0x260] sm:$0xff]
        %v1675 = vld [vmem:[#allocation2 + $0x268] sm:$0xff]
        %v1676 = vld [vmem:[#allocation2 + $0x270] sm:$0xff]
        %v1677 = vld [vmem:[#allocation2 + $0x278] sm:$0xff]
        %v1678 = vld [vmem:[#allocation2 + $0x280] sm:$0xff]
        %v1679 = vld [vmem:[#allocation2 + $0x288] sm:$0xff]
        %v1680 = vld [vmem:[#allocation2 + $0x290] sm:$0xff]
        %v1681 = vld [vmem:[#allocation2 + $0x298] sm:$0xff]
        %v1682 = vld [vmem:[#allocation2 + $0x2a0] sm:$0xff]
        %v1683 = vld [vmem:[#allocation2 + $0x2a8] sm:$0xff]
        %v1684 = vld [vmem:[#allocation2 + $0x2b0] sm:$0xff]
        %v1685 = vld [vmem:[#allocation2 + $0x2b8] sm:$0xff]
        %v1686 = vld [vmem:[#allocation2 + $0x2c0] sm:$0xff]
        %v1687 = vld [vmem:[#allocation2 + $0x2c8] sm:$0xff]
        %v1688 = vld [vmem:[#allocation2 + $0x2d0] sm:$0xff]
        %v1689 = vld [vmem:[#allocation2 + $0x2d8] sm:$0xff]
        %v1690 = vld [vmem:[#allocation2 + $0x2e0] sm:$0xff]
        %v1691 = vld [vmem:[#allocation2 + $0x2e8] sm:$0xff]
        %v1692 = vld [vmem:[#allocation2 + $0x2f0] sm:$0xff]
        %v1693 = vld [vmem:[#allocation2 + $0x2f8] sm:$0xff]
        %v1694 = vld [vmem:[#allocation2 + $0x300] sm:$0xff]
        %v1695 = vld [vmem:[#allocation2 + $0x308] sm:$0xff]
        %v1696 = vld [vmem:[%s2 + $0x9] sm:$0x1]
        %v1697 = vlaneseq
        %v1698 = vshrl.u32 %v1697, 7
        %v1699 = vsub.s32 0, %v1698
        %v1700 = vrot.slane %v1696, %v1699
        %1701 = vmatprep.subr.mxu0 0.0
        %1702 = vmatpush1.msra.mxu0 %v1679
        %1703 = vmatprep.subr.mxu0 0.0
        %1704 = vmatpush1.msra.mxu0 %v1678
        %1705 = vmatprep.subr.mxu0 0.0
        %1706 = vmatpush1.msra.mxu0 %v1677
        %1707 = vmatprep.subr.mxu0 0.0
        %1708 = vmatpush1.msra.mxu0 %v1676
        %1709 = vmatprep.subr.mxu0 0.0
        %1710 = vmatpush1.msra.mxu0 %v1675
        %1711 = vmatprep.subr.mxu0 0.0
        %1712 = vmatpush1.msra.mxu0 %v1674
        %1713 = vmatprep.subr.mxu0 0.0
        %1714 = vmatpush1.msra.mxu0 %v1673
        %1715 = vmatprep.subr.mxu0 0.0
        %1716 = vmatpush1.msra.mxu0 %v1672
        %1717 = vmatprep.subr.mxu0 0.0
        %1718 = vmatpush1.msra.mxu0 %v1671
        %1719 = vmatprep.subr.mxu0 0.0
        %1720 = vmatpush1.msra.mxu0 %v1670
        %1721 = vmatprep.subr.mxu0 0.0
        %1722 = vmatpush1.msra.mxu0 %v1669
        %1723 = vmatprep.subr.mxu0 0.0
        %1724 = vmatpush1.msra.mxu0 %v1668
        %1725 = vmatprep.subr.mxu0 0.0
        %1726 = vmatpush1.msra.mxu0 %v1667
        %1727 = vmatprep.subr.mxu0 0.0
        %1728 = vmatpush1.msra.mxu0 %v1666
        %1729 = vmatprep.subr.mxu0 0.0
        %1730 = vmatpush1.msra.mxu0 %v1665
        %1731 = vmatprep.subr.mxu0 0.0
        %1732 = vmatpush1.msra.mxu0 %v1664
        %1733 = vmatprep.subr.mxu0 0.0
        %1734 = vmatpush2.msra.mxu0 %v1695
        %1735 = vmatprep.subr.mxu0 0.0
        %1736 = vmatpush2.msra.mxu0 %v1694
        %1737 = vmatprep.subr.mxu0 0.0
        %1738 = vmatpush2.msra.mxu0 %v1693
        %1739 = vmatprep.subr.mxu0 0.0
        %1740 = vmatpush2.msra.mxu0 %v1692
        %1741 = vmatprep.subr.mxu0 0.0
        %1742 = vmatpush2.msra.mxu0 %v1691
        %1743 = vmatprep.subr.mxu0 0.0
        %1744 = vmatpush2.msra.mxu0 %v1690
        %1745 = vmatprep.subr.mxu0 0.0
        %1746 = vmatpush2.msra.mxu0 %v1689
        %1747 = vmatprep.subr.mxu0 0.0
        %1748 = vmatpush2.msra.mxu0 %v1688
        %1749 = vmatprep.subr.mxu0 0.0
        %1750 = vmatpush2.msra.mxu0 %v1687
        %1751 = vmatprep.subr.mxu0 0.0
        %1752 = vmatpush2.msra.mxu0 %v1686
        %1753 = vmatprep.subr.mxu0 0.0
        %1754 = vmatpush2.msra.mxu0 %v1685
        %1755 = vmatprep.subr.mxu0 0.0
        %1756 = vmatpush2.msra.mxu0 %v1684
        %1757 = vmatprep.subr.mxu0 0.0
        %1758 = vmatpush2.msra.mxu0 %v1683
        %1759 = vmatprep.subr.mxu0 0.0
        %1760 = vmatpush2.msra.mxu0 %v1682
        %1761 = vmatprep.subr.mxu0 0.0
        %1762 = vmatpush2.msra.mxu0 %v1681
        %1763 = vmatprep.subr.mxu0 0.0
        %1764 = vmatpush2.msra.mxu0 %v1680
        %1765 = vmatprep.mubr.f32.mxu0 %v1648
        %1766 = vmatmul.mubr.f32.gmra.mxu0 %v1616
        %v1767 = vpop.f32.mrf.mxu0
        %v1768 = vadd.f32 %v1700, %v1767
        %v1769 = vpop.f32.mrf.mxu0
        %1770 = vmatprep.mubr.f32.mxu0 %v1649
        %1771 = vmatmul.mubr.f32.gmra.mxu0 %v1617
        %v1772 = vpop.f32.mrf.mxu0
        %v1773 = vadd.f32 %v1700, %v1772
        %v1774 = vpop.f32.mrf.mxu0
        %1775 = vmatprep.mubr.f32.mxu0 %v1650
        %1776 = vmatmul.mubr.f32.gmra.mxu0 %v1618
        %v1777 = vpop.f32.mrf.mxu0
        %v1778 = vadd.f32 %v1700, %v1777
        %v1779 = vpop.f32.mrf.mxu0
        %1780 = vmatprep.mubr.f32.mxu0 %v1651
        %1781 = vmatmul.mubr.f32.gmra.mxu0 %v1619
        %v1782 = vpop.f32.mrf.mxu0
        %v1783 = vadd.f32 %v1700, %v1782
        %v1784 = vpop.f32.mrf.mxu0
        %1785 = vmatprep.mubr.f32.mxu0 %v1652
        %1786 = vmatmul.mubr.f32.gmra.mxu0 %v1620
        %v1787 = vpop.f32.mrf.mxu0
        %v1788 = vadd.f32 %v1700, %v1787
        %v1789 = vpop.f32.mrf.mxu0
        %1790 = vmatprep.mubr.f32.mxu0 %v1653
        %1791 = vmatmul.mubr.f32.gmra.mxu0 %v1621
        %v1792 = vpop.f32.mrf.mxu0
        %v1793 = vadd.f32 %v1700, %v1792
        %v1794 = vpop.f32.mrf.mxu0
        %1795 = vmatprep.mubr.f32.mxu0 %v1654
        %1796 = vmatmul.mubr.f32.gmra.mxu0 %v1622
        %v1797 = vpop.f32.mrf.mxu0
        %v1798 = vadd.f32 %v1700, %v1797
        %v1799 = vpop.f32.mrf.mxu0
        %1800 = vmatprep.mubr.f32.mxu0 %v1655
        %1801 = vmatmul.mubr.f32.gmra.mxu0 %v1623
        %v1802 = vpop.f32.mrf.mxu0
        %v1803 = vadd.f32 %v1700, %v1802
        %v1804 = vpop.f32.mrf.mxu0
        %1805 = vmatprep.mubr.f32.mxu0 %v1656
        %1806 = vmatmul.mubr.f32.gmra.mxu0 %v1624
        %v1807 = vpop.f32.mrf.mxu0
        %v1808 = vadd.f32 %v1700, %v1807
        %v1809 = vpop.f32.mrf.mxu0
        %1810 = vmatprep.mubr.f32.mxu0 %v1657
        %1811 = vmatmul.mubr.f32.gmra.mxu0 %v1625
        %v1812 = vpop.f32.mrf.mxu0
        %v1813 = vadd.f32 %v1700, %v1812
        %v1814 = vpop.f32.mrf.mxu0
        %1815 = vmatprep.mubr.f32.mxu0 %v1658
        %1816 = vmatmul.mubr.f32.gmra.mxu0 %v1626
        %v1817 = vpop.f32.mrf.mxu0
        %v1818 = vadd.f32 %v1700, %v1817
        %v1819 = vpop.f32.mrf.mxu0
        %1820 = vmatprep.mubr.f32.mxu0 %v1659
        %1821 = vmatmul.mubr.f32.gmra.mxu0 %v1627
        %v1822 = vpop.f32.mrf.mxu0
        %v1823 = vadd.f32 %v1700, %v1822
        %v1824 = vpop.f32.mrf.mxu0
        %1825 = vmatprep.mubr.f32.mxu0 %v1660
        %1826 = vmatmul.mubr.f32.gmra.mxu0 %v1628
        %v1827 = vpop.f32.mrf.mxu0
        %v1828 = vadd.f32 %v1700, %v1827
        %v1829 = vpop.f32.mrf.mxu0
        %1830 = vmatprep.mubr.f32.mxu0 %v1661
        %1831 = vmatmul.mubr.f32.gmra.mxu0 %v1629
        %v1832 = vpop.f32.mrf.mxu0
        %v1833 = vadd.f32 %v1700, %v1832
        %v1834 = vpop.f32.mrf.mxu0
        %1835 = vmatprep.mubr.f32.mxu0 %v1662
        %1836 = vmatmul.mubr.f32.gmra.mxu0 %v1630
        %v1837 = vpop.f32.mrf.mxu0
        %v1838 = vadd.f32 %v1700, %v1837
        %v1839 = vpop.f32.mrf.mxu0
        %1840 = vmatprep.mubr.f32.mxu0 %v1663
        %1841 = vmatmul.mubr.f32.gmra.mxu0 %v1631
        %v1842 = vpop.f32.mrf.mxu0
        %v1843 = vadd.f32 %v1700, %v1842
        %v1844 = vpop.f32.mrf.mxu0
        %1845 = vdwg.mxu0
        %v1846 = vtanh.pop %v1768
        %v1847 = vtanh.pop %v1773
        %v1848 = vtanh.pop %v1778
        %v1849 = vtanh.pop %v1783
        %v1850 = vtanh.pop %v1788
        %v1851 = vtanh.pop %v1793
        %v1852 = vtanh.pop %v1798
        %v1853 = vtanh.pop %v1803
        %v1854 = vtanh.pop %v1808
        %v1855 = vtanh.pop %v1813
        %v1856 = vtanh.pop %v1818
        %v1857 = vtanh.pop %v1823
        %v1858 = vtanh.pop %v1828
        %v1859 = vtanh.pop %v1833
        %v1860 = vtanh.pop %v1838
        %v1861 = vtanh.pop %v1843
        %1862 = vst [vmem:[%s187] sm:$0xff] %v1846
        %1863 = vst [vmem:[%s187 + $0x8] sm:$0xff] %v1847
        %1864 = vst [vmem:[%s187 + $0x10] sm:$0xff] %v1848
        %1865 = vst [vmem:[%s187 + $0x18] sm:$0xff] %v1849
        %1866 = vst [vmem:[%s187 + $0x20] sm:$0xff] %v1850
        %1867 = vst [vmem:[%s187 + $0x28] sm:$0xff] %v1851
        %1868 = vst [vmem:[%s187 + $0x30] sm:$0xff] %v1852
        %1869 = vst [vmem:[%s187 + $0x38] sm:$0xff] %v1853
        %1870 = vst [vmem:[%s187 + $0x40] sm:$0xff] %v1854
        %1871 = vst [vmem:[%s187 + $0x48] sm:$0xff] %v1855
        %1872 = vst [vmem:[%s187 + $0x50] sm:$0xff] %v1856
        %1873 = vst [vmem:[%s187 + $0x58] sm:$0xff] %v1857
        %1874 = vst [vmem:[%s187 + $0x60] sm:$0xff] %v1858
        %1875 = vst [vmem:[%s187 + $0x68] sm:$0xff] %v1859
        %1876 = vst [vmem:[%s187 + $0x70] sm:$0xff] %v1860
        %1877 = vst [vmem:[%s187 + $0x78] sm:$0xff] %v1861
        %s1878 = smul.u32 16, %s15
        %p1879 = scmp.lt.s32.totalorder %s1878, 31
        %s1880 = scalar_select %p1879, %s1878, 31
        %s1881 = smul.addr %s1880, 8
        %s1882 = scalar_lea.vmem %s3, %s1881
        // Predicated region
        $region37: #{actor_net_smooth.1} parent=31 // pred_check
          %p1883 = pneg %p101
        $region38: #{actor_net_smooth.1} parent=31 // pred_check_branch
          %1885 = sbr.rel (%p1883) target = $region40
        $region39: #{actor_net_smooth.1} parent=31 // pred_region
          %s1886 = smul.u32 16, %s15
        $region40: #{actor_net_smooth.1} parent=31 // pred_fallthru
          _
      $region32: #{actor_net_smooth.1} parent=5 // pred_fallthru
        _
      %p1887 = scmp.le.s32.totalorder 2, %s10
      // Predicated region
      $region41: #{actor_net_smooth.1} parent=5 // pred_check
        %p1888 = pneg %p1887
      $region42: #{actor_net_smooth.1} parent=5 // pred_check_branch
        %1890 = sbr.rel (%p1888) target = $region44
      $region43: #{actor_net_smooth.1} parent=5 // pred_region
        %s1891 = ssub.s32 %s10, 2
        // Predicated region
        $region45: #{actor_net_smooth.1} parent=43 // pred_check
          %p1892 = pneg %p107
        $region46: #{actor_net_smooth.1} parent=43 // pred_check_branch
          %1894 = sbr.rel (%p1892) target = $region48
        $region47: #{actor_net_smooth.1} parent=43 // pred_region
          %s1895 = smul.u32 16, %s16
          %p1896 = scmp.lt.s32.totalorder %s1895, 31
          %s1897 = scalar_select %p1896, %s1895, 31
          %s1898 = smul.addr %s1897, 8
          %s1899 = scalar_lea.vmem %s3, %s1898
        $region48: #{actor_net_smooth.1} parent=43 // pred_fallthru
          _
      $region44: #{actor_net_smooth.1} parent=5 // pred_fallthru
        _
    $region6: #{actor_net_smooth.1} parent=1 // loop_footer
      %s14 = sadd.s32 1, %s10
    $region7: #{actor_net_smooth.1} parent=1 // loop_footer_branch
      %9 = sbr.rel target = $region3
    $region8: #{actor_net_smooth.1} parent=1 // loop_exit
      _
    %1900 = vsyncpa [#allocation3], 1
    %s1901 = scalar_lea.sflag [#allocation3], 1
    %1902 = vsyncpa %s1901, 1

</llo_original>
